<compile_context>
chip_gen: v6e
topology: v6e:2x2x1
jax: 0.10.0
libtpu: 0.0.40
codegen_flags: <defaults>
</compile_context>

<pallas_src>
import functools
import numpy as np

import jax
import jax.numpy as jnp
from jax.experimental import pallas as pl
from jax.experimental.pallas import tpu as pltpu

hparams = {'multiscale_gate': True, 'clamp_gate': 0.05}

COMPUTE_DTYPE = jnp.bfloat16          # MXU inputs / interior activations
_VMEM_LIMIT_BYTES = 56 * 1024 * 1024  # above the 32 MiB default, below v7x's 64 MiB phys
_MAX_TILE_M = 4096                    # flat-row tile cap for halo-free convs


# --------------------------------------------------------------------------------------
# Pallas kernels
# --------------------------------------------------------------------------------------
def _accumulate(x_refs, w_ref, m, src_cfg):
    """f32 accumulator = sum over sources / tap-groups of (m, K_g) @ (K_g, Cout).

    src_cfg: tuple of (cin, groups, nrefs) per source.  `groups` is a tuple of tuples
    of flat start offsets; taps inside a group are concatenated along K (lane axis) so
    one MXU dot consumes len(group)*cin weight rows.  nrefs==2 means the source is the
    elementwise product of two consecutive input refs (FAM fusion)."""
    acc = None
    row = 0
    ri = 0
    for cin, groups, nrefs in src_cfg:
        a_ref = x_refs[ri]
        b_ref = x_refs[ri + 1] if nrefs == 2 else None
        ri += nrefs
        for group in groups:
            parts = []
            for s in group:                                   # contiguous static slices
                patch = a_ref[0, s:s + m, :]
                if b_ref is not None:
                    patch = patch * b_ref[0, s:s + m, :]      # FAM: x1*x2, hidden under MXU
                parts.append(patch)
            block = parts[0] if len(parts) == 1 else jnp.concatenate(parts, axis=-1)
            kk = cin * len(group)
            d = jnp.dot(block, w_ref[row:row + kk, :],        # bf16 x bf16 -> f32 MXU
                        preferred_element_type=jnp.float32)
            acc = d if acc is None else acc + d
            row += kk
    return acc


def _conv_kernel(*refs, src_cfg, relu, skip_ref_idx, skip_off, n_x):
    """Fused conv: grouped tap/source accumulation + bias (+ ReLU) (+ residual skip)."""
    x_refs = refs[:n_x]
    w_ref, b_ref = refs[n_x], refs[n_x + 1]
    pos = n_x + 2
    skip_ref = None
    if skip_ref_idx == -1:                 # skip supplied as an extra input ref
        skip_ref = refs[pos]
        pos += 1
    elif skip_ref_idx is not None:         # skip re-uses one of the conv sources
        skip_ref = x_refs[skip_ref_idx]
    o_ref = refs[pos]

    m = o_ref.shape[1]
    acc = _accumulate(x_refs, w_ref, m, src_cfg)
    acc = acc + b_ref[...].astype(jnp.float32)          # bias once, at the end
    if relu:
        acc = jnp.maximum(acc, 0.0)
    if skip_ref is not None:
        acc = acc + skip_ref[0, skip_off:skip_off + m, :].astype(jnp.float32)
    o_ref[0, :, :] = acc.astype(o_ref.dtype)


def _conv_gate_kernel(*refs, src_cfg, clamp, n_x):
    """Fused conv (Cout=4) + LBAG gate epilogue, single output:
       ch0 = clamp_min(sigmoid(logit0)); ch1:3 = logit1:3 * gate + skip."""
    x_refs = refs[:n_x]
    w_ref, b_ref, skip_ref, o_ref = refs[n_x], refs[n_x + 1], refs[n_x + 2], refs[n_x + 3]
    m = o_ref.shape[1]
    acc = _accumulate(x_refs, w_ref, m, src_cfg) + b_ref[...].astype(jnp.float32)
    gate = jax.nn.sigmoid(acc[:, 0:1])                   # EUP, hidden under MXU
    if clamp > 0:
        gate = jnp.maximum(gate, clamp)
    out = acc * gate + skip_ref[0, :, :].astype(jnp.float32)     # skip ch0 is zero
    col = jax.lax.broadcasted_iota(jnp.int32, out.shape, 1)
    out = jnp.where(col == 0, jnp.broadcast_to(gate, out.shape), out)  # gate -> channel 0
    o_ref[0, :, :] = out.astype(o_ref.dtype)


def _pick_tile(m, cap=_MAX_TILE_M):
    """Largest divisor of m that is <= cap and a multiple of 8 (else m itself)."""
    if m <= cap:
        return m
    t = cap - (cap % 8)
    while t >= 8:
        if m % t == 0:
            return t
        t -= 8
    return m


@functools.partial(
    jax.jit,
    static_argnames=('src_cfg', 'm_out', 'relu', 'clamp', 'gate', 'skip_ref_idx',
                     'skip_off', 'out_dtype'))
def _fused_conv_call(xs, w, b, skip, *, src_cfg, m_out, relu, clamp, gate,
                     skip_ref_idx, skip_off, out_dtype):
    """xs: tuple of (N, M_i, C_i) bf16 flat inputs; w: (K_total, Cout) bf16;
       b: (1, Cout) f32; skip (optional, f32/bf16): (N, M_s, C_s)."""
    n = int(xs[0].shape[0])
    cout = int(w.shape[1])
    n_x = len(xs)

    # Halo-free convs (1x1 / fused-concat) get a spatial row-block grid axis.
    can_tile = (skip is None and skip_ref_idx is None and not gate
                and all(nrefs == 1 and all(s == 0 for g in groups for s in g)
                        for _, groups, nrefs in src_cfg)
                and all(int(x.shape[1]) == m_out for x in xs))
    tm = _pick_tile(m_out) if can_tile else m_out
    nb = m_out // tm

    in_specs = []
    for x in xs:
        c = int(x.shape[2])
        if can_tile:
            in_specs.append(pl.BlockSpec((1, tm, c), lambda i, r: (i, r, 0)))
        else:
            in_specs.append(pl.BlockSpec((1, int(x.shape[1]), c), lambda i, r: (i, 0, 0)))
    in_specs.append(pl.BlockSpec((int(w.shape[0]), cout), lambda i, r: (0, 0)))
    in_specs.append(pl.BlockSpec((1, cout), lambda i, r: (0, 0)))
    args = list(xs) + [w, b]
    if skip is not None:
        in_specs.append(pl.BlockSpec((1, int(skip.shape[1]), int(skip.shape[2])),
                                     lambda i, r: (i, 0, 0)))
        args.append(skip)

    if gate:
        kern = functools.partial(_conv_gate_kernel, src_cfg=src_cfg, clamp=clamp, n_x=n_x)
    else:
        kern = functools.partial(_conv_kernel, src_cfg=src_cfg, relu=relu,
                                 skip_ref_idx=skip_ref_idx, skip_off=skip_off, n_x=n_x)

    flops = 2 * n * m_out * int(w.shape[0]) * cout
    bytes_accessed = (sum(int(x.size) * x.dtype.itemsize for x in xs)
                      + int(w.size) * w.dtype.itemsize
                      + int(b.size) * b.dtype.itemsize
                      + (int(skip.size) * skip.dtype.itemsize if skip is not None else 0)
                      + n * m_out * cout * jnp.dtype(out_dtype).itemsize)

    return pl.pallas_call(
        kern,
        out_shape=jax.ShapeDtypeStruct((n, m_out, cout), out_dtype),
        grid=(n, nb),
        in_specs=in_specs,
        out_specs=pl.BlockSpec((1, tm, cout), lambda i, r: (i, r, 0)),
        compiler_params=pltpu.CompilerParams(
            dimension_semantics=("parallel", "parallel"),
            vmem_limit_bytes=_VMEM_LIMIT_BYTES),
        cost_estimate=pl.CostEstimate(flops=int(flops),
                                      transcendentals=int(n * m_out if gate else 0),
                                      bytes_accessed=int(bytes_accessed)),
    )(*args)


# --------------------------------------------------------------------------------------
# Conv wrappers (padding / flattening glue; all FLOPs stay in the Pallas kernels)
# --------------------------------------------------------------------------------------
def _prep_k(x, k):
    """Pad NHWC x for a kxk stride-1 pad=k//2 conv in wide-pitch flat form.
       Channels are zero-padded to a multiple of 8 for aligned K slices.
       Returns (xf (n, hp*pitch, cin_p) bf16, pitch, hp, cin_p)."""
    n, h, w, cin = x.shape
    cin_p = -(-cin // 8) * 8
    if k == 1:
        pitch, hp = w, h
        xp = x if cin_p == cin else jnp.pad(x, ((0, 0), (0, 0), (0, 0), (0, cin_p - cin)))
    else:
        pad = k // 2
        pitch = w + (k - 1)               # wide pitch == padded width
        hp = h + k                        # extra zero rows for flat-slice overrun
        xp = jnp.pad(x, ((0, 0), (pad, hp - h - pad), (pad, pitch - w - pad),
                         (0, cin_p - cin)))
    return xp.reshape(n, hp * pitch, cin_p).astype(COMPUTE_DTYPE), pitch, hp, cin_p


def _pad_w_rows(w, num_taps, cin, cin_p):
    """Insert zero weight rows so taps consume cin_p (multiple of 8) rows each."""
    if cin_p == cin:
        return w
    cout = w.shape[1]
    return jnp.pad(w.reshape(num_taps, cin, cout),
                   ((0, 0), (0, cin_p - cin), (0, 0))).reshape(num_taps * cin_p, cout)


def _row_groups(k, pitch):
    """Tap groups (one per kernel row) -> K = k*cin per MXU dot."""
    return tuple(tuple(dh * pitch + dw for dw in range(k)) for dh in range(k))


def _conv_basic(x, p, out_dtype=None):
    """kxk stride-1 conv (pad=k//2) + bias (+ ReLU)."""
    k = p['k']
    n, h, w, cin = x.shape
    xf, pitch, hp, cin_p = _prep_k(x, k)
    wq = _pad_w_rows(p['w'], k * k, cin, cin_p)
    m_out = h * pitch
    cout = int(p['w'].shape[1])
    od = COMPUTE_DTYPE if out_dtype is None else out_dtype
    y = _fused_conv_call((xf,), wq, p['b'], None,
                         src_cfg=((cin_p, _row_groups(k, pitch), 1),), m_out=m_out,
                         relu=p['relu'], clamp=0.0, gate=False,
                         skip_ref_idx=None, skip_off=0, out_dtype=od)
    y = y.reshape(n, h, pitch, cout)
    return y if pitch == w else y[:, :, :w, :]


def _conv_stride2(x, p):
    """Conv2d(cin, cout, 3, stride=2, pad=1) via exact space-to-depth weight folding:
       a stride-1 2x2 conv over 4*cin channels (K = 8*cin per grouped dot)."""
    n, h, w, cin = x.shape
    h2, w2 = h // 2, w // 2
    xp = jnp.pad(x, ((0, 0), (1, 3), (1, 1), (0, 0)))             # (n, h+4, w+2, cin)
    s2d = xp.reshape(n, h2 + 2, 2, w2 + 1, 2, cin)
    s2d = jnp.transpose(s2d, (0, 1, 3, 2, 4, 5)).reshape(n, h2 + 2, w2 + 1, 4 * cin)
    pitch = w2 + 1
    xf = s2d.reshape(n, (h2 + 2) * pitch, 4 * cin).astype(COMPUTE_DTYPE)
    groups = ((0, 1), (pitch, pitch + 1))
    m_out = h2 * pitch
    cout = int(p['w'].shape[1])                                    # w is pre-folded
    y = _fused_conv_call((xf,), p['w'], p['b'], None,
                         src_cfg=((4 * cin, groups, 1),), m_out=m_out,
                         relu=p['relu'], clamp=0.0, gate=False,
                         skip_ref_idx=None, skip_off=0, out_dtype=COMPUTE_DTYPE)
    return y.reshape(n, h2, pitch, cout)[:, :, :w2, :]


def apply_basic(x, p, out_dtype=None):
    if p.get('transpose'):
        return apply_transposed(x, p)
    if p['stride'] == 2:
        return _conv_stride2(x, p)
    return _conv_basic(x, p, out_dtype=out_dtype)


def apply_transposed(x, p):
    """ConvTranspose2d(k=4, s=2, p=1) + bias + ReLU as ONE pallas_call: the 4 sub-pixel
       phases are folded into a single 3x3 weight with 4*cout lanes; pixel shuffle in
       the wrapper.  (Phase/tap mapping unvalidated against real PyTorch weights.)"""
    n, h, w, cin = x.shape
    cout = p['cout']
    xf, pitch, hp, cin_p = _prep_k(x, 3)
    m_out = h * pitch
    y = _fused_conv_call((xf,), p['w'], p['b4'], None,
                         src_cfg=((cin_p, _row_groups(3, pitch), 1),), m_out=m_out,
                         relu=p['relu'], clamp=0.0, gate=False,
                         skip_ref_idx=None, skip_off=0, out_dtype=COMPUTE_DTYPE)
    y = y.reshape(n, h, pitch, 4, cout)[:, :, :w]                  # phases (dh, dw)
    y = y.reshape(n, h, w, 2, 2, cout)
    return jnp.transpose(y, (0, 1, 3, 2, 4, 5)).reshape(n, 2 * h, 2 * w, cout)


def apply_concat_conv1x1(xs, p):
    """1x1 conv over channel-concat(xs), concat fused into the kernel (K-split);
       odd channel counts (SCM's 3 / cout-3 sources) are zero-padded to multiples
       of 8 with matching zero weight rows."""
    n, h, w, _ = xs[0].shape
    m_out = h * w
    cout = int(p['w'].shape[1])
    cs = [int(x.shape[-1]) for x in xs]
    cps = [-(-c // 8) * 8 for c in cs]
    flats = []
    for x, c, cp in zip(xs, cs, cps):
        xb = x if cp == c else jnp.pad(x, ((0, 0), (0, 0), (0, 0), (0, cp - c)))
        flats.append(xb.reshape(n, m_out, cp).astype(COMPUTE_DTYPE))
    if cps == cs:
        wq = p['w']
    else:
        blocks, row = [], 0
        for c, cp in zip(cs, cps):
            wb = p['w'][row:row + c, :]
            if cp != c:
                wb = jnp.pad(wb, ((0, cp - c), (0, 0)))
            blocks.append(wb)
            row += c
        wq = jnp.concatenate(blocks, axis=0)
    src_cfg = tuple((cp, ((0,),), 1) for cp in cps)
    y = _fused_conv_call(tuple(flats), wq, p['b'], None, src_cfg=src_cfg,
                         m_out=m_out, relu=p['relu'], clamp=0.0, gate=False,
                         skip_ref_idx=None, skip_off=0, out_dtype=COMPUTE_DTYPE)
    return y.reshape(n, h, w, cout)


def apply_gate_conv(z, p, skip_img, clamp):
    """ConvsOut / feat_extract[5] (3x3, Cout=4) with the LBAG gate fused into the
       epilogue.  Returns (out 3ch, gate 1ch) in f32."""
    n, h, w, cin = z.shape
    zf, pitch, hp, cin_p = _prep_k(z, 3)
    wq = _pad_w_rows(p['w'], 9, cin, cin_p)
    m_out = h * pitch
    skip4 = jnp.pad(skip_img.astype(jnp.float32),
                    ((0, 0), (0, 0), (0, pitch - w), (1, 0)))      # zero channel 0
    skip4 = skip4.reshape(n, m_out, 4)
    y = _fused_conv_call((zf,), wq, p['b'], skip4,
                         src_cfg=((cin_p, _row_groups(3, pitch), 1),), m_out=m_out,
                         relu=False, clamp=clamp, gate=True,
                         skip_ref_idx=-1, skip_off=0, out_dtype=jnp.float32)
    y = y.reshape(n, h, pitch, 4)[:, :, :w, :]
    return y[..., 1:4], y[..., 0:1]


# --------------------------------------------------------------------------------------
# Sub-module forwards
# --------------------------------------------------------------------------------------
def apply_seq(x, convs):
    for p in convs:
        x = apply_basic(x, p)
    return x


def apply_resblock(x, rb):
    """ResBlock: conv-relu-conv + x, with the residual fused into the 2nd conv kernel
       (skip read from the already-padded conv-1 input at flat offset pitch+1)."""
    p1, p2 = rb
    n, h, w, c = x.shape
    xf, pitch, hp, _ = _prep_k(x, 3)
    groups = _row_groups(3, pitch)
    m_out = h * pitch
    y1 = _fused_conv_call((xf,), p1['w'], p1['b'], None,
                          src_cfg=((c, groups, 1),), m_out=m_out,
                          relu=True, clamp=0.0, gate=False,
                          skip_ref_idx=None, skip_off=0, out_dtype=COMPUTE_DTYPE)
    y1 = y1.reshape(n, h, pitch, c)[:, :, :w, :]
    y1f, _, _, _ = _prep_k(y1, 3)
    y2 = _fused_conv_call((y1f,), p2['w'], p2['b'], xf,
                          src_cfg=((c, groups, 1),), m_out=m_out,
                          relu=False, clamp=0.0, gate=False,
                          skip_ref_idx=-1, skip_off=pitch + 1, out_dtype=COMPUTE_DTYPE)
    return y2.reshape(n, h, pitch, c)[:, :, :w, :]


def apply_block(x, blocks):          # EBlock / DBlock
    for rb in blocks:
        x = apply_resblock(x, rb)
    return x


def apply_aff(p, x1, x2, x4):        # concat fused into the 1x1 conv kernel
    y = apply_concat_conv1x1([x1, x2, x4], p[0])
    return apply_basic(y, p[1])


def apply_fam(p, x1, x2):
    """FAM: x1 + conv3x3(x1 * x2), fully fused (product per tap + residual epilogue)."""
    n, h, w, c = x1.shape
    x1f, pitch, hp, _ = _prep_k(x1, 3)
    x2f, _, _, _ = _prep_k(x2, 3)
    m_out = h * pitch
    y = _fused_conv_call((x1f, x2f), p['w'], p['b'], None,
                         src_cfg=((c, _row_groups(3, pitch), 2),), m_out=m_out,
                         relu=False, clamp=0.0, gate=False,
                         skip_ref_idx=0, skip_off=pitch + 1, out_dtype=COMPUTE_DTYPE)
    return y.reshape(n, h, pitch, c)[:, :, :w, :]


def apply_scm(p, x):
    y = apply_seq(x, p['main'])
    return apply_concat_conv1x1([x, y], p['conv'])


def _down2(x):   # F.interpolate(scale_factor=0.5, mode='nearest')
    return x[:, ::2, ::2, :]


def _up2(x):     # F.interpolate(scale_factor=2, mode='nearest')
    return jnp.repeat(jnp.repeat(x, 2, axis=1), 2, axis=2)


# --------------------------------------------------------------------------------------
# Deterministic parameter construction (shapes from the PyTorch module __init__)
# --------------------------------------------------------------------------------------
class _KeyGen:
    def __init__(self, seed):
        self._key = jax.random.PRNGKey(seed)

    def __call__(self):
        self._key, k = jax.random.split(self._key)
        return k


def _fold_s2d_weight(w9, cin, cout):
    """(9*cin, cout) tap-major 3x3 weight -> (16*cin, cout) space-to-depth folded
       2x2-over-4*cin weight (rows: tap (a,b) major, then phase (p,q), then cin)."""
    w = w9.reshape(3, 3, cin, cout)
    w = jnp.pad(w, ((0, 1), (0, 1), (0, 0), (0, 0)))     # (4,4,cin,cout), zeros at idx 3
    w = w.reshape(2, 2, 2, 2, cin, cout)                 # (a, p, b, q, cin, cout)
    w = jnp.transpose(w, (0, 2, 1, 3, 4, 5))             # (a, b, p, q, cin, cout)
    return w.reshape(16 * cin, cout)


def make_basic(kg, cin, cout, k, stride=1, relu=True):
    fan_in = cin * k * k
    bound = 1.0 / np.sqrt(fan_in)
    # weight rows ordered tap-major (kh, kw) then cin -> (k*k*cin, cout)
    w = jax.random.uniform(kg(), (k * k * cin, cout), jnp.float32, -bound, bound)
    b = jax.random.uniform(kg(), (1, cout), jnp.float32, -bound, bound)
    if stride == 2:
        assert k == 3
        w = _fold_s2d_weight(w, cin, cout)
    return dict(w=w.astype(COMPUTE_DTYPE), b=b, k=k, stride=stride, relu=relu)


def make_transposed(kg, cin, cout, relu=True):
    """ConvTranspose2d(cin, cout, 4, stride=2, padding=1) parameterized as 4 sub-pixel
       2x2 phase kernels, folded into one 3x3 weight with 4*cout output channels.
       TODO(synk): re-derive phase/tap extraction if real PyTorch checkpoints are used."""
    bound = 1.0 / np.sqrt(cin * 16)
    phases = [jax.random.uniform(kg(), (2, 2, cin, cout), jnp.float32, -bound, bound)
              for _ in range(4)]
    b = jax.random.uniform(kg(), (1, cout), jnp.float32, -bound, bound)
    wf = jnp.zeros((3, 3, cin, 4 * cout), jnp.float32)
    for pi, (dh, dw) in enumerate(((0, 0), (0, 1), (1, 0), (1, 1))):
        for a in range(2):
            for bb in range(2):
                wf = wf.at[dh + a, dw + bb, :, pi * cout:(pi + 1) * cout].set(
                    phases[pi][a, bb])
    return dict(w=wf.reshape(9 * cin, 4 * cout).astype(COMPUTE_DTYPE),
                b4=jnp.tile(b, (1, 4)), cout=cout, relu=relu, transpose=True)


def build_lbag(seed=42, num_res=2):
    kg = _KeyGen(seed)
    base = 32

    def resblock(c):
        return [make_basic(kg, c, c, 3, relu=True), make_basic(kg, c, c, 3, relu=False)]

    def block(c):
        return [resblock(c) for _ in range(num_res)]

    def aff(cin, cout):
        return [make_basic(kg, cin, cout, 1, relu=True),
                make_basic(kg, cout, cout, 3, relu=False)]

    def scm(cout):
        return dict(
            main=[make_basic(kg, 3, cout // 4, 3, relu=True),
                  make_basic(kg, cout // 4, cout // 2, 1, relu=True),
                  make_basic(kg, cout // 2, cout // 2, 3, relu=True),
                  make_basic(kg, cout // 2, cout - 3, 1, relu=True)],
            conv=make_basic(kg, cout, cout, 1, relu=False))

    return dict(
        Encoder=[block(base), block(base * 2), block(base * 4)],
        feat_extract=[
            make_basic(kg, 3, base, 3, relu=True),
            make_basic(kg, base, base * 2, 3, stride=2, relu=True),
            make_basic(kg, base * 2, base * 4, 3, stride=2, relu=True),
            make_transposed(kg, base * 4, base * 2, relu=True),
            make_transposed(kg, base * 2, base, relu=True),
            make_basic(kg, base, 4, 3, relu=False)],
        Decoder=[block(base * 4), block(base * 2), block(base)],
        Convs=[make_basic(kg, base * 4, base * 2, 1, relu=True),
               make_basic(kg, base * 2, base, 1, relu=True)],
        ConvsOut=[make_basic(kg, base * 4, 4, 3, relu=False),
                  make_basic(kg, base * 2, 4, 3, relu=False)],
        AFFs=[aff(base * 7, base), aff(base * 7, base * 2)],
        FAM1=make_basic(kg, base * 4, base * 4, 3, relu=False), SCM1=scm(base * 4),
        FAM2=make_basic(kg, base * 2, base * 2, 3, relu=False), SCM2=scm(base * 2))


# --------------------------------------------------------------------------------------
# LBAG forward (mirrors the PyTorch forward exactly; NCHW in / NCHW out)
# --------------------------------------------------------------------------------------
def lbag_forward(params, x_nchw):
    x = jnp.transpose(x_nchw, (0, 2, 3, 1)).astype(jnp.float32)   # NHWC
    x_2 = _down2(x)
    x_4 = _down2(x_2)
    z2 = apply_scm(params['SCM2'], x_2)
    z4 = apply_scm(params['SCM1'], x_4)
    outputs, gate_xs = [], []
    clamp = float(hparams['clamp_gate'])

    x_ = apply_basic(x, params['feat_extract'][0])
    res1 = apply_block(x_, params['Encoder'][0])
    z = apply_basic(res1, params['feat_extract'][1])
    z = apply_fam(params['FAM2'], z, z2)
    res2 = apply_block(z, params['Encoder'][1])
    z = apply_basic(res2, params['feat_extract'][2])
    z = apply_fam(params['FAM1'], z, z4)
    z = apply_block(z, params['Encoder'][2])

    z12 = _down2(res1)
    z21 = _up2(res2)
    z42 = _up2(z)
    z41 = _up2(z42)
    res2 = apply_aff(params['AFFs'][1], z12, res2, z42)
    res1 = apply_aff(params['AFFs'][0], res1, z21, z41)
    # drop1 / drop2 (nn.Dropout2d) are identity in eval mode.

    z = apply_block(z, params['Decoder'][0])
    if hparams.get('multiscale_gate', True):
        out, gate = apply_gate_conv(z, params['ConvsOut'][0], x_4, clamp)
        outputs.append(out)
        gate_xs.append(gate)
    else:
        z_ = apply_basic(z, params['ConvsOut'][0], out_dtype=jnp.float32)
        outputs.append(z_[..., 1:] + x_4)
    z = apply_transposed(z, params['feat_extract'][3])

    z = apply_concat_conv1x1([z, res2], params['Convs'][0])
    z = apply_block(z, params['Decoder'][1])
    if hparams.get('multiscale_gate', True):
        out, gate = apply_gate_conv(z, params['ConvsOut'][1], x_2, clamp)
        outputs.append(out)
        gate_xs.append(gate)
    else:
        z_ = apply_basic(z, params['ConvsOut'][1], out_dtype=jnp.float32)
        outputs.append(z_[..., 1:] + x_2)
    z = apply_transposed(z, params['feat_extract'][4])

    z = apply_concat_conv1x1([z, res1], params['Convs'][1])
    z = apply_block(z, params['Decoder'][2])
    out, gate = apply_gate_conv(z, params['feat_extract'][5], x, clamp)
    outputs.append(out)
    gate_xs.append(gate)

    to_nchw = lambda t: jnp.transpose(t, (0, 3, 1, 2))
    return [to_nchw(o) for o in outputs], [to_nchw(g) for g in gate_xs]


# --------------------------------------------------------------------------------------
if __name__ == "__main__":
    # num_res=2 (LBAG constructor arg) keeps the synthetic model small; the structure of
    # every sub-module (Encoder/Decoder/AFF/FAM/SCM/gating) is preserved.
    params = build_lbag(seed=42, num_res=2)
    x = jax.random.normal(jax.random.PRNGKey(0), (2, 3, 32, 32), jnp.float32)  # NCHW
    outputs, gate_xs = lbag_forward(params, x)
    jax.block_until_ready((outputs, gate_xs))

    assert outputs[0].shape == (2, 3, 8, 8)
    assert outputs[1].shape == (2, 3, 16, 16)
    assert outputs[2].shape == (2, 3, 32, 32)
    assert gate_xs[0].shape == (2, 1, 8, 8)
    assert gate_xs[1].shape == (2, 1, 16, 16)
    assert gate_xs[2].shape == (2, 1, 32, 32)
    assert all(bool(jnp.all(jnp.isfinite(o))) for o in outputs)
    assert all(bool(jnp.all((g >= hparams['clamp_gate']) & (g <= 1.0))) for g in gate_xs)
    print("KERNEL_OK")
</pallas_src>

<mosaic_0001>
module attributes {stable_mosaic.version = 11 : i64} {
  func.func @_conv_kernel(%arg0: i32, %arg1: i32, %arg2: memref<1x342x8xbf16, #tpu.memory_space<vmem>>, %arg3: memref<72x16xbf16, #tpu.memory_space<vmem>>, %arg4: memref<1x16xf32, #tpu.memory_space<vmem>>, %arg5: memref<1x288x16xbf16, #tpu.memory_space<vmem>>) attributes {dimension_semantics = [#tpu.dimension_semantics<parallel>, #tpu.dimension_semantics<parallel>], iteration_bounds = array<i64: 2, 1>, scalar_prefetch = 0 : i64, scratch_operands = 0 : i64, tpu.core_type = #tpu.core_type<tc>, window_params = [{transform_indices = @transform_0, window_bounds = array<i64: 1, 342, 8>}, {pipeline_mode = #tpu.pipeline_mode<synchronous>, transform_indices = @transform_1, window_bounds = array<i64: 72, 16>}, {pipeline_mode = #tpu.pipeline_mode<synchronous>, transform_indices = @transform_2, window_bounds = array<i64: 1, 16>}, {transform_indices = @transform_3, window_bounds = array<i64: 1, 288, 16>}]} {
    %c0 = arith.constant 0 : index
    %c0_0 = arith.constant 0 : index
    %c0_1 = arith.constant 0 : index
    %0 = vector.load %arg2[%c0, %c0_0, %c0_1] : memref<1x342x8xbf16, #tpu.memory_space<vmem>>, vector<1x288x8xbf16>
    %1 = vector.shape_cast %0 : vector<1x288x8xbf16> to vector<288x8xbf16>
    %c0_2 = arith.constant 0 : index
    %c1 = arith.constant 1 : index
    %c0_3 = arith.constant 0 : index
    %2 = vector.load %arg2[%c0_2, %c1, %c0_3] : memref<1x342x8xbf16, #tpu.memory_space<vmem>>, vector<1x288x8xbf16>
    %3 = vector.shape_cast %2 : vector<1x288x8xbf16> to vector<288x8xbf16>
    %c0_4 = arith.constant 0 : index
    %c2 = arith.constant 2 : index
    %c0_5 = arith.constant 0 : index
    %4 = vector.load %arg2[%c0_4, %c2, %c0_5] : memref<1x342x8xbf16, #tpu.memory_space<vmem>>, vector<1x288x8xbf16>
    %5 = vector.shape_cast %4 : vector<1x288x8xbf16> to vector<288x8xbf16>
    %6 = tpu.concatenate %1, %3, %5 in 1 : vector<288x8xbf16>, vector<288x8xbf16>, vector<288x8xbf16> -> vector<288x24xbf16>
    %c0_6 = arith.constant 0 : index
    %c0_7 = arith.constant 0 : index
    %7 = vector.load %arg3[%c0_6, %c0_7] : memref<72x16xbf16, #tpu.memory_space<vmem>>, vector<24x16xbf16>
    %cst = arith.constant dense<0.000000e+00> : vector<288x16xf32>
    %8 = tpu.matmul %6, %7, %cst {dimension_numbers = #tpu.dot_dimension_numbers<[1], [0], [0], [1], [0, 0, 1, 1], [], []>} : vector<288x24xbf16>, vector<24x16xbf16>, vector<288x16xf32> -> vector<288x16xf32>
    %c0_8 = arith.constant 0 : index
    %c18 = arith.constant 18 : index
    %c0_9 = arith.constant 0 : index
    %9 = vector.load %arg2[%c0_8, %c18, %c0_9] : memref<1x342x8xbf16, #tpu.memory_space<vmem>>, vector<1x288x8xbf16>
    %10 = vector.shape_cast %9 : vector<1x288x8xbf16> to vector<288x8xbf16>
    %c0_10 = arith.constant 0 : index
    %c19 = arith.constant 19 : index
    %c0_11 = arith.constant 0 : index
    %11 = vector.load %arg2[%c0_10, %c19, %c0_11] : memref<1x342x8xbf16, #tpu.memory_space<vmem>>, vector<1x288x8xbf16>
    %12 = vector.shape_cast %11 : vector<1x288x8xbf16> to vector<288x8xbf16>
    %c0_12 = arith.constant 0 : index
    %c20 = arith.constant 20 : index
    %c0_13 = arith.constant 0 : index
    %13 = vector.load %arg2[%c0_12, %c20, %c0_13] : memref<1x342x8xbf16, #tpu.memory_space<vmem>>, vector<1x288x8xbf16>
    %14 = vector.shape_cast %13 : vector<1x288x8xbf16> to vector<288x8xbf16>
    %15 = tpu.concatenate %10, %12, %14 in 1 : vector<288x8xbf16>, vector<288x8xbf16>, vector<288x8xbf16> -> vector<288x24xbf16>
    %c24 = arith.constant 24 : index
    %c0_14 = arith.constant 0 : index
    %16 = vector.load %arg3[%c24, %c0_14] : memref<72x16xbf16, #tpu.memory_space<vmem>>, vector<24x16xbf16>
    %cst_15 = arith.constant dense<0.000000e+00> : vector<288x16xf32>
    %17 = tpu.matmul %15, %16, %cst_15 {dimension_numbers = #tpu.dot_dimension_numbers<[1], [0], [0], [1], [0, 0, 1, 1], [], []>} : vector<288x24xbf16>, vector<24x16xbf16>, vector<288x16xf32> -> vector<288x16xf32>
    %18 = arith.addf %8, %17 : vector<288x16xf32>
    %c0_16 = arith.constant 0 : index
    %c36 = arith.constant 36 : index
    %c0_17 = arith.constant 0 : index
    %19 = vector.load %arg2[%c0_16, %c36, %c0_17] : memref<1x342x8xbf16, #tpu.memory_space<vmem>>, vector<1x288x8xbf16>
    %20 = vector.shape_cast %19 : vector<1x288x8xbf16> to vector<288x8xbf16>
    %c0_18 = arith.constant 0 : index
    %c37 = arith.constant 37 : index
    %c0_19 = arith.constant 0 : index
    %21 = vector.load %arg2[%c0_18, %c37, %c0_19] : memref<1x342x8xbf16, #tpu.memory_space<vmem>>, vector<1x288x8xbf16>
    %22 = vector.shape_cast %21 : vector<1x288x8xbf16> to vector<288x8xbf16>
    %c0_20 = arith.constant 0 : index
    %c38 = arith.constant 38 : index
    %c0_21 = arith.constant 0 : index
    %23 = vector.load %arg2[%c0_20, %c38, %c0_21] : memref<1x342x8xbf16, #tpu.memory_space<vmem>>, vector<1x288x8xbf16>
    %24 = vector.shape_cast %23 : vector<1x288x8xbf16> to vector<288x8xbf16>
    %25 = tpu.concatenate %20, %22, %24 in 1 : vector<288x8xbf16>, vector<288x8xbf16>, vector<288x8xbf16> -> vector<288x24xbf16>
    %c48 = arith.constant 48 : index
    %c0_22 = arith.constant 0 : index
    %26 = vector.load %arg3[%c48, %c0_22] : memref<72x16xbf16, #tpu.memory_space<vmem>>, vector<24x16xbf16>
    %cst_23 = arith.constant dense<0.000000e+00> : vector<288x16xf32>
    %27 = tpu.matmul %25, %26, %cst_23 {dimension_numbers = #tpu.dot_dimension_numbers<[1], [0], [0], [1], [0, 0, 1, 1], [], []>} : vector<288x24xbf16>, vector<24x16xbf16>, vector<288x16xf32> -> vector<288x16xf32>
    %28 = arith.addf %18, %27 : vector<288x16xf32>
    %c0_24 = arith.constant 0 : index
    %c0_25 = arith.constant 0 : index
    %29 = vector.load %arg4[%c0_24, %c0_25] : memref<1x16xf32, #tpu.memory_space<vmem>>, vector<1x16xf32>
    %30 = vector.broadcast %29 : vector<1x16xf32> to vector<288x16xf32>
    %31 = arith.addf %28, %30 : vector<288x16xf32>
    %cst_26 = arith.constant 0.000000e+00 : f32
    %32 = vector.broadcast %cst_26 : f32 to vector<288x16xf32>
    %33 = arith.maximumf %31, %32 : vector<288x16xf32>
    %34 = arith.truncf %33 : vector<288x16xf32> to vector<288x16xbf16>
    %c0_27 = arith.constant 0 : index
    %c0_28 = arith.constant 0 : index
    %c0_29 = arith.constant 0 : index
    %35 = vector.load %arg5[%c0_27, %c0_28, %c0_29] : memref<1x288x16xbf16, #tpu.memory_space<vmem>>, vector<1x288x16xbf16>
    %36 = vector.shape_cast %35 : vector<1x288x16xbf16> to vector<288x16xbf16>
    %37 = vector.shape_cast %34 : vector<288x16xbf16> to vector<1x288x16xbf16>
    tpu.vector_store %arg5[%c0_27, %c0_28, %c0_29], %37 {strides = array<i32>} : memref<1x288x16xbf16, #tpu.memory_space<vmem>>, vector<1x288x16xbf16>,
    return
  }
  func.func @transform_0(%arg0: i32, %arg1: i32) -> (i32, i32, i32) {
    %c0_i32 = arith.constant 0 : i32
    %c0_i32_0 = arith.constant 0 : i32
    %c0_i32_1 = arith.constant 0 : i32
    return %arg0, %c0_i32, %c0_i32_0 : i32, i32, i32
  }
  func.func @transform_1(%arg0: i32, %arg1: i32) -> (i32, i32) {
    %c0_i32 = arith.constant 0 : i32
    %c0_i32_0 = arith.constant 0 : i32
    %c0_i32_1 = arith.constant 0 : i32
    return %c0_i32, %c0_i32_0 : i32, i32
  }
  func.func @transform_2(%arg0: i32, %arg1: i32) -> (i32, i32) {
    %c0_i32 = arith.constant 0 : i32
    %c0_i32_0 = arith.constant 0 : i32
    %c0_i32_1 = arith.constant 0 : i32
    return %c0_i32, %c0_i32_0 : i32, i32
  }
  func.func @transform_3(%arg0: i32, %arg1: i32) -> (i32, i32, i32) {
    %c0_i32 = arith.constant 0 : i32
    %c0_i32_0 = arith.constant 0 : i32
    return %arg0, %arg1, %c0_i32 : i32, i32, i32
  }
}

</mosaic_0001>

<llo_original>
// kernel: _fused_conv_call.1
$region0: #{_fused_conv_call.1}
  #allocation0 [shape = 'u32[]', space=smem, size = 0x4, offset = 0x4, fixed_abs, tag = 'smem constant byte address 0x4 - core index']
  #allocation1 [shape = 'u32[144,128]{1,0:T(1,128)}', space=vmem, size = 0x12000, scoped, tag = 'internal scratch']
  %s0 = inlined_call_operand.vmem [shape: bf16[2,342,8], index: 0, kind: input, shape index: {}]
  %s1 = inlined_call_operand.vmem [shape: bf16[72,16], index: 1, kind: input, shape index: {}]
  %s2 = inlined_call_operand.vmem [shape: f32[1,16], index: 2, kind: input, shape index: {}]
  %s3 = inlined_call_operand.vmem [shape: bf16[2,288,16], index: 3, kind: output, shape index: {}]
  %s4 = sld [smem:[#allocation0]]
  $region45: #{_fused_conv_call.1} parent=0
    _
  %s6 = ssub.s32 1, %s4
  %s7 = scalar_select 0, %s6, %s4
  loop: start=0, step=1, limit=4
  $region2: #{_fused_conv_call.1} parent=0 // loop_pre_header
    _
  $region3: #{_fused_conv_call.1} parent=0 // loop_header
    %s9 = sphi 0, %s13
    %p10 = scmp.ge.s32.totalorder %s9, 4
    %s16 = sphi 0, %s28
    %s17 = sphi 0, %s24
    %s18 = sphi 0, %s16
    %s19 = sphi 0, %s17
    %s20 = sphi 0, %s18
    %s21 = sphi 0, %s19
    %s31 = sphi 0, %s33
    %s34 = sphi 0, %s31
    %s35 = sphi 0, %s34
    %s51 = sphi 0, %s35
    %s55 = sphi 0, %s55
    %s57 = sphi 0, %s55
    %s58 = sphi 0, %s57
    %s72 = sphi 0, %s58
    %s76 = sphi 0, %s76
    %s78 = sphi 0, %s76
    %s79 = sphi 0, %s78
    %s93 = sphi 0, %s79
    %s101 = sphi 0, %s103
    %s104 = sphi 0, %s101
    %s105 = sphi 0, %s104
    %s121 = sphi 0, %s105
  $region4: #{_fused_conv_call.1} parent=0 // loop_header_branch
    %12 = sbr.rel (%p10) target = $region8
  $region5: #{_fused_conv_call.1} parent=0 // loop_body
    %s14 = ssub.s32 %s9, 1
    %s15 = ssub.s32 %s9, 2
    %s22 = sadd.s32 1, %s17
    %p23 = scmp.ge.s32.totalorder %s22, 1
    %s24 = scalar_select %p23, 0, %s22
    %s25 = sadd.s32 1, %s16
    %s26 = scalar_select %p23, %s25, %s16
    %p27 = scmp.ge.s32.totalorder %s26, 2
    %s28 = scalar_select %p27, 0, %s26
    %s29 = ssub.s32 %s16, %s28
    %p30 = scmp.eq.s32.totalorder %s29, 0
    %s32 = sadd.s32 %s31, 1
    %s33 = scalar_select %p30, %s31, %s32
    %p36 = pneg %p30
    %p37 = scmp.eq.s32.totalorder %s9, 1
    %p38 = por %p36, %p37
    %p39 = scmp.ne.s32.totalorder %s31, %s34
    %p40 = scmp.eq.s32.totalorder %s9, 0
    %p41 = por %p39, %p40
    %p42 = scmp.ne.s32.totalorder %s31, %s34
    %p43 = scmp.eq.s32.totalorder %s14, 1
    %p44 = por %p42, %p43
    %p45 = scmp.ne.s32.totalorder %s34, %s35
    %p46 = scmp.eq.s32.totalorder %s14, 0
    %p47 = por %p45, %p46
    %p48 = scmp.ne.s32.totalorder %s34, %s35
    %p49 = scmp.eq.s32.totalorder %s15, 1
    %p50 = por %p48, %p49
    %p52 = scmp.ne.s32.totalorder %s35, %s51
    %p53 = scmp.eq.s32.totalorder %s15, 0
    %p54 = por %p52, %p53
    %s56 = sadd.s32 %s55, 1
    %p59 = scmp.eq.s32.totalorder %s9, 1
    %p60 = scmp.ne.s32.totalorder %s55, %s57
    %p61 = scmp.eq.s32.totalorder %s9, 0
    %p62 = por %p60, %p61
    %p63 = scmp.ne.s32.totalorder %s55, %s57
    %p64 = scmp.eq.s32.totalorder %s14, 1
    %p65 = por %p63, %p64
    %p66 = scmp.ne.s32.totalorder %s57, %s58
    %p67 = scmp.eq.s32.totalorder %s14, 0
    %p68 = por %p66, %p67
    %p69 = scmp.ne.s32.totalorder %s57, %s58
    %p70 = scmp.eq.s32.totalorder %s15, 1
    %p71 = por %p69, %p70
    %p73 = scmp.ne.s32.totalorder %s58, %s72
    %p74 = scmp.eq.s32.totalorder %s15, 0
    %p75 = por %p73, %p74
    %s77 = sadd.s32 %s76, 1
    %p80 = scmp.eq.s32.totalorder %s9, 1
    %p81 = scmp.ne.s32.totalorder %s76, %s78
    %p82 = scmp.eq.s32.totalorder %s9, 0
    %p83 = por %p81, %p82
    %p84 = scmp.ne.s32.totalorder %s76, %s78
    %p85 = scmp.eq.s32.totalorder %s14, 1
    %p86 = por %p84, %p85
    %p87 = scmp.ne.s32.totalorder %s78, %s79
    %p88 = scmp.eq.s32.totalorder %s14, 0
    %p89 = por %p87, %p88
    %p90 = scmp.ne.s32.totalorder %s78, %s79
    %p91 = scmp.eq.s32.totalorder %s15, 1
    %p92 = por %p90, %p91
    %p94 = scmp.ne.s32.totalorder %s79, %s93
    %p95 = scmp.eq.s32.totalorder %s15, 0
    %p96 = por %p94, %p95
    %s97 = ssub.s32 %s16, %s28
    %s98 = ssub.s32 %s17, %s24
    %s99 = sor.u32 %s97, %s98
    %p100 = scmp.eq.s32.totalorder %s99, 0
    %s102 = sadd.s32 %s101, 1
    %s103 = scalar_select %p100, %s101, %s102
    %p106 = pneg %p100
    %p107 = scmp.eq.s32.totalorder %s9, 1
    %p108 = por %p106, %p107
    %p109 = scmp.ne.s32.totalorder %s101, %s104
    %p110 = scmp.eq.s32.totalorder %s9, 0
    %p111 = por %p109, %p110
    %p112 = scmp.ne.s32.totalorder %s101, %s104
    %p113 = scmp.eq.s32.totalorder %s14, 1
    %p114 = por %p112, %p113
    %p115 = scmp.ne.s32.totalorder %s104, %s105
    %p116 = scmp.eq.s32.totalorder %s14, 0
    %p117 = por %p115, %p116
    %p118 = scmp.ne.s32.totalorder %s104, %s105
    %p119 = scmp.eq.s32.totalorder %s15, 1
    %p120 = por %p118, %p119
    %p122 = scmp.ne.s32.totalorder %s105, %s121
    %p123 = scmp.eq.s32.totalorder %s15, 0
    %p124 = por %p122, %p123
    %p125 = scmp.le.s32.totalorder 1, %s9
    %p126 = scmp.lt.s32.totalorder %s9, 3
    %p127 = pnand %p125, %p126
    %p128 = pneg %p127
    // Predicated region
    $region9: #{_fused_conv_call.1} parent=5 // pred_check
      _
    $region10: #{_fused_conv_call.1} parent=5 // pred_check_branch
      %130 = sbr.rel (%p127) target = $region12
    $region11: #{_fused_conv_call.1} parent=5 // pred_region
      %s131 = ssub.s32 %s9, 1
      // Predicated region
      $region13: #{_fused_conv_call.1} parent=11 // pred_check
        %p132 = pneg %p68
      $region14: #{_fused_conv_call.1} parent=11 // pred_check_branch
        %134 = sbr.rel (%p132) target = $region16
      $region15: #{_fused_conv_call.1} parent=11 // pred_region
        _
      $region16: #{_fused_conv_call.1} parent=11 // pred_fallthru
        _
      // Predicated region
      $region17: #{_fused_conv_call.1} parent=11 // pred_check
        %p135 = pneg %p89
      $region18: #{_fused_conv_call.1} parent=11 // pred_check_branch
        %137 = sbr.rel (%p135) target = $region20
      $region19: #{_fused_conv_call.1} parent=11 // pred_region
        _
      $region20: #{_fused_conv_call.1} parent=11 // pred_fallthru
        _
    $region12: #{_fused_conv_call.1} parent=5 // pred_fallthru
      _
    %p138 = scmp.lt.s32.totalorder %s9, 2
    // Predicated region
    $region21: #{_fused_conv_call.1} parent=5 // pred_check
      %p139 = pneg %p138
    $region22: #{_fused_conv_call.1} parent=5 // pred_check_branch
      %141 = sbr.rel (%p139) target = $region24
    $region23: #{_fused_conv_call.1} parent=5 // pred_region
      // Predicated region
      $region25: #{_fused_conv_call.1} parent=23 // pred_check
        %p142 = pneg %p41
      $region26: #{_fused_conv_call.1} parent=23 // pred_check_branch
        %144 = sbr.rel (%p142) target = $region28
      $region27: #{_fused_conv_call.1} parent=23 // pred_region
        %p145 = scmp.lt.s32.totalorder %s16, 1
        %s146 = scalar_select %p145, %s16, 1
        %s147 = smul.addr %s146, 43
        %s148 = smul.addr %s147, 4
        %s149 = scalar_lea.vmem %s0, %s148
      $region28: #{_fused_conv_call.1} parent=23 // pred_fallthru
        _
    $region24: #{_fused_conv_call.1} parent=5 // pred_fallthru
      _
    %p150 = scmp.le.s32.totalorder 1, %s9
    %p151 = scmp.lt.s32.totalorder %s9, 3
    %p152 = pnand %p150, %p151
    %p153 = pneg %p152
    // Predicated region
    $region29: #{_fused_conv_call.1} parent=5 // pred_check
      _
    $region30: #{_fused_conv_call.1} parent=5 // pred_check_branch
      %155 = sbr.rel (%p152) target = $region32
    $region31: #{_fused_conv_call.1} parent=5 // pred_region
      %s156 = ssub.s32 %s9, 1
      %p157 = scmp.lt.s32.totalorder %s18, 1
      %s158 = scalar_select %p157, %s18, 1
      %s159 = smul.addr %s158, 43
      %s160 = smul.addr %s159, 4
      %s161 = scalar_lea.vmem %s0, %s160
      %p162 = pneg %p47
      %p163 = pneg %p44
      %p164 = pneg %p68
      %p165 = pneg %p65
      %p166 = pneg %p89
      %p167 = pneg %p86
      %p168 = pneg %p117
      %p169 = pneg %p114
      %s170 = smul.u32 36, %s19
      %p171 = scmp.lt.s32.totalorder %s18, 1
      %s172 = scalar_select %p171, %s18, 1
      %p173 = scmp.lt.s32.totalorder %s170, 35
      %s174 = scalar_select %p173, %s170, 35
      %s175 = smul.addr %s172, 36
      %s176 = sadd.s32 %s174, %s175
      %s177 = smul.addr %s176, 4
      %s178 = scalar_lea.vmem %s3, %s177
      %p179 = scmp.lt.s32.totalorder %s18, 1
      %s180 = scalar_select %p179, %s18, 1
      %s181 = smul.addr %s180, 43
      %s182 = smul.addr %s181, 4
      %s183 = scalar_lea.vmem %s0, %s182
      %s184 = smul.u32 36, %s19
      %p185 = scmp.lt.s32.totalorder %s18, 1
      %s186 = scalar_select %p185, %s18, 1
      %p187 = scmp.lt.s32.totalorder %s184, 35
      %s188 = scalar_select %p187, %s184, 35
      %s189 = smul.addr %s186, 36
      %s190 = sadd.s32 %s188, %s189
      %s191 = smul.addr %s190, 4
      %s192 = scalar_lea.vmem %s3, %s191
      %s193 = smul.u32 36, %s19
      %v195 = vld [vmem:[%s183] sm:$0xf]
      %v196 = vld [vmem:[%s183 + $0x4] sm:$0xf]
      %v197 = vld [vmem:[%s183 + $0x8] sm:$0xf]
      %v198 = vld [vmem:[%s183 + $0xc] sm:$0xf]
      %v199 = vld [vmem:[%s183 + $0x10] sm:$0xf]
      %v200 = vld [vmem:[%s183 + $0x14] sm:$0xf]
      %v201 = vld [vmem:[%s183 + $0x18] sm:$0xf]
      %v202 = vld [vmem:[%s183 + $0x1c] sm:$0xf]
      %v203 = vld [vmem:[%s183 + $0x20] sm:$0xf]
      %v204 = vld [vmem:[%s183 + $0x24] sm:$0xf]
      %v205 = vld [vmem:[%s183 + $0x28] sm:$0xf]
      %v206 = vld [vmem:[%s183 + $0x2c] sm:$0xf]
      %v207 = vld [vmem:[%s183 + $0x30] sm:$0xf]
      %v208 = vld [vmem:[%s183 + $0x34] sm:$0xf]
      %v209 = vld [vmem:[%s183 + $0x38] sm:$0xf]
      %v210 = vld [vmem:[%s183 + $0x3c] sm:$0xf]
      %v211 = vld [vmem:[%s183 + $0x40] sm:$0xf]
      %v212 = vld [vmem:[%s183 + $0x44] sm:$0xf]
      %v213 = vld [vmem:[%s183 + $0x48] sm:$0xf]
      %v214 = vld [vmem:[%s183 + $0x4c] sm:$0xf]
      %v215 = vld [vmem:[%s183 + $0x50] sm:$0xf]
      %v216 = vld [vmem:[%s183 + $0x54] sm:$0xf]
      %v217 = vld [vmem:[%s183 + $0x58] sm:$0xf]
      %v218 = vld [vmem:[%s183 + $0x5c] sm:$0xf]
      %v219 = vld [vmem:[%s183 + $0x60] sm:$0xf]
      %v220 = vld [vmem:[%s183 + $0x64] sm:$0xf]
      %v221 = vld [vmem:[%s183 + $0x68] sm:$0xf]
      %v222 = vld [vmem:[%s183 + $0x6c] sm:$0xf]
      %v223 = vld [vmem:[%s183 + $0x70] sm:$0xf]
      %v224 = vld [vmem:[%s183 + $0x74] sm:$0xf]
      %v225 = vld [vmem:[%s183 + $0x78] sm:$0xf]
      %v226 = vld [vmem:[%s183 + $0x7c] sm:$0xf]
      %v227 = vld [vmem:[%s183 + $0x80] sm:$0xf]
      %v228 = vld [vmem:[%s183 + $0x84] sm:$0xf]
      %v229 = vld [vmem:[%s183 + $0x88] sm:$0xf]
      %v230 = vld [vmem:[%s183 + $0x8c] sm:$0xf]
      %v231 = vld [vmem:[%s183 + $0x90] sm:$0x1]
      %v232 = vld [vmem:[%s183] sm:$0xe]
      %v269 = vunpack.c.l.b16 %v195
      %v270 = vunpack.c.l.b16 %v196
      %v271 = vunpack.c.l.b16 %v197
      %v272 = vunpack.c.l.b16 %v198
      %v273 = vunpack.c.l.b16 %v199
      %v274 = vunpack.c.l.b16 %v200
      %v275 = vunpack.c.l.b16 %v201
      %v276 = vunpack.c.l.b16 %v202
      %v277 = vunpack.c.l.b16 %v203
      %v278 = vunpack.c.l.b16 %v204
      %v279 = vunpack.c.l.b16 %v205
      %v280 = vunpack.c.l.b16 %v206
      %v281 = vunpack.c.l.b16 %v207
      %v282 = vunpack.c.l.b16 %v208
      %v283 = vunpack.c.l.b16 %v209
      %v284 = vunpack.c.l.b16 %v210
      %v285 = vunpack.c.l.b16 %v211
      %v286 = vunpack.c.l.b16 %v212
      %v287 = vunpack.c.l.b16 %v213
      %v288 = vunpack.c.l.b16 %v214
      %v289 = vunpack.c.l.b16 %v215
      %v290 = vunpack.c.l.b16 %v216
      %v291 = vunpack.c.l.b16 %v217
      %v292 = vunpack.c.l.b16 %v218
      %v293 = vunpack.c.l.b16 %v219
      %v294 = vunpack.c.l.b16 %v220
      %v295 = vunpack.c.l.b16 %v221
      %v296 = vunpack.c.l.b16 %v222
      %v297 = vunpack.c.l.b16 %v223
      %v298 = vunpack.c.l.b16 %v224
      %v299 = vunpack.c.l.b16 %v225
      %v300 = vunpack.c.l.b16 %v226
      %v301 = vunpack.c.l.b16 %v227
      %v302 = vunpack.c.l.b16 %v228
      %v303 = vunpack.c.l.b16 %v229
      %v304 = vunpack.c.l.b16 %v230
      %v305 = vpack.c.b16 %v270, %v269
      %v306 = vpack.c.b16 %v272, %v271
      %v307 = vpack.c.b16 %v274, %v273
      %v308 = vpack.c.b16 %v276, %v275
      %v309 = vpack.c.b16 %v278, %v277
      %v310 = vpack.c.b16 %v280, %v279
      %v311 = vpack.c.b16 %v282, %v281
      %v312 = vpack.c.b16 %v284, %v283
      %v313 = vpack.c.b16 %v286, %v285
      %v314 = vpack.c.b16 %v288, %v287
      %v315 = vpack.c.b16 %v290, %v289
      %v316 = vpack.c.b16 %v292, %v291
      %v317 = vpack.c.b16 %v294, %v293
      %v318 = vpack.c.b16 %v296, %v295
      %v319 = vpack.c.b16 %v298, %v297
      %v320 = vpack.c.b16 %v300, %v299
      %v321 = vpack.c.b16 %v302, %v301
      %v322 = vpack.c.b16 %v304, %v303
      %v324 = vunpack.c.l.b16 %v231
      %v325 = vpack.c.b16 %v324, %v324
      %vm326 = vsmask.f32 7424
      %v328 = vshrl.u32 %v305, 16
      %v330 = vshll.u32 %v305, 16
      %v332 = vrot.slane %v330, 1
      %v333 = vor.u32 %v328, %v332
      %v335 = vshll.u32 %v306, 16
      %v337 = vrot.slane %v335, 1
      %v338 = vsel %vm326, %v333, %v337
      %v339 = vshrl.u32 %v306, 16
      %v341 = vor.u32 %v339, %v337
      %v343 = vshll.u32 %v307, 16
      %v345 = vrot.slane %v343, 1
      %v346 = vsel %vm326, %v341, %v345
      %v347 = vshrl.u32 %v307, 16
      %v349 = vor.u32 %v347, %v345
      %v351 = vshll.u32 %v308, 16
      %v353 = vrot.slane %v351, 1
      %v354 = vsel %vm326, %v349, %v353
      %v355 = vshrl.u32 %v308, 16
      %v357 = vor.u32 %v355, %v353
      %v359 = vshll.u32 %v309, 16
      %v361 = vrot.slane %v359, 1
      %v362 = vsel %vm326, %v357, %v361
      %v363 = vshrl.u32 %v309, 16
      %v365 = vor.u32 %v363, %v361
      %v367 = vshll.u32 %v310, 16
      %v369 = vrot.slane %v367, 1
      %v370 = vsel %vm326, %v365, %v369
      %v371 = vshrl.u32 %v310, 16
      %v373 = vor.u32 %v371, %v369
      %v375 = vshll.u32 %v311, 16
      %v377 = vrot.slane %v375, 1
      %v378 = vsel %vm326, %v373, %v377
      %v379 = vshrl.u32 %v311, 16
      %v381 = vor.u32 %v379, %v377
      %v383 = vshll.u32 %v312, 16
      %v385 = vrot.slane %v383, 1
      %v386 = vsel %vm326, %v381, %v385
      %v387 = vshrl.u32 %v312, 16
      %v389 = vor.u32 %v387, %v385
      %v391 = vshll.u32 %v313, 16
      %v393 = vrot.slane %v391, 1
      %v394 = vsel %vm326, %v389, %v393
      %v395 = vshrl.u32 %v313, 16
      %v397 = vor.u32 %v395, %v393
      %v399 = vshll.u32 %v314, 16
      %v401 = vrot.slane %v399, 1
      %v402 = vsel %vm326, %v397, %v401
      %v403 = vshrl.u32 %v314, 16
      %v405 = vor.u32 %v403, %v401
      %v407 = vshll.u32 %v315, 16
      %v409 = vrot.slane %v407, 1
      %v410 = vsel %vm326, %v405, %v409
      %v411 = vshrl.u32 %v315, 16
      %v413 = vor.u32 %v411, %v409
      %v415 = vshll.u32 %v316, 16
      %v417 = vrot.slane %v415, 1
      %v418 = vsel %vm326, %v413, %v417
      %v419 = vshrl.u32 %v316, 16
      %v421 = vor.u32 %v419, %v417
      %v423 = vshll.u32 %v317, 16
      %v425 = vrot.slane %v423, 1
      %v426 = vsel %vm326, %v421, %v425
      %v427 = vshrl.u32 %v317, 16
      %v429 = vor.u32 %v427, %v425
      %v431 = vshll.u32 %v318, 16
      %v433 = vrot.slane %v431, 1
      %v434 = vsel %vm326, %v429, %v433
      %v435 = vshrl.u32 %v318, 16
      %v437 = vor.u32 %v435, %v433
      %v439 = vshll.u32 %v319, 16
      %v441 = vrot.slane %v439, 1
      %v442 = vsel %vm326, %v437, %v441
      %v443 = vshrl.u32 %v319, 16
      %v445 = vor.u32 %v443, %v441
      %v447 = vshll.u32 %v320, 16
      %v449 = vrot.slane %v447, 1
      %v450 = vsel %vm326, %v445, %v449
      %v451 = vshrl.u32 %v320, 16
      %v453 = vor.u32 %v451, %v449
      %v455 = vshll.u32 %v321, 16
      %v457 = vrot.slane %v455, 1
      %v458 = vsel %vm326, %v453, %v457
      %v459 = vshrl.u32 %v321, 16
      %v461 = vor.u32 %v459, %v457
      %v463 = vshll.u32 %v322, 16
      %v465 = vrot.slane %v463, 1
      %v466 = vsel %vm326, %v461, %v465
      %v467 = vshrl.u32 %v322, 16
      %v469 = vor.u32 %v467, %v465
      %v471 = vshll.u32 %v325, 16
      %v473 = vrot.slane %v471, 1
      %v474 = vsel %vm326, %v469, %v473
      %475 = vrot.lane.b32.xlu0 %v338, 8
      %v476 = vpop.permute.xlu0 %475
      %477 = vrot.lane.b32.xlu0 %v346, 8
      %v478 = vpop.permute.xlu0 %477
      %479 = vrot.lane.b32.xlu0 %v354, 8
      %v480 = vpop.permute.xlu0 %479
      %481 = vrot.lane.b32.xlu0 %v362, 8
      %v482 = vpop.permute.xlu0 %481
      %483 = vrot.lane.b32.xlu0 %v370, 8
      %v484 = vpop.permute.xlu0 %483
      %485 = vrot.lane.b32.xlu0 %v378, 8
      %v486 = vpop.permute.xlu0 %485
      %487 = vrot.lane.b32.xlu0 %v386, 8
      %v488 = vpop.permute.xlu0 %487
      %489 = vrot.lane.b32.xlu0 %v394, 8
      %v490 = vpop.permute.xlu0 %489
      %491 = vrot.lane.b32.xlu0 %v402, 8
      %v492 = vpop.permute.xlu0 %491
      %493 = vrot.lane.b32.xlu0 %v410, 8
      %v494 = vpop.permute.xlu0 %493
      %495 = vrot.lane.b32.xlu0 %v418, 8
      %v496 = vpop.permute.xlu0 %495
      %497 = vrot.lane.b32.xlu0 %v426, 8
      %v498 = vpop.permute.xlu0 %497
      %499 = vrot.lane.b32.xlu0 %v434, 8
      %v500 = vpop.permute.xlu0 %499
      %501 = vrot.lane.b32.xlu0 %v442, 8
      %v502 = vpop.permute.xlu0 %501
      %503 = vrot.lane.b32.xlu0 %v450, 8
      %v504 = vpop.permute.xlu0 %503
      %505 = vrot.lane.b32.xlu0 %v458, 8
      %v506 = vpop.permute.xlu0 %505
      %507 = vrot.lane.b32.xlu0 %v466, 8
      %v508 = vpop.permute.xlu0 %507
      %509 = vrot.lane.b32.xlu0 %v474, 8
      %v510 = vpop.permute.xlu0 %509
      %v512 = vunpack.c.l.b16 %v232
      %v513 = vpack.c.b16 %v270, %v512
      %vm514 = vcmask 1046528
      %v515 = vrot.slane %v513, 1
      %v516 = vrot.slane %v306, 1
      %v517 = vsel %vm514, %v515, %v516
      %v518 = vrot.slane %v307, 1
      %v519 = vsel %vm514, %v516, %v518
      %v520 = vrot.slane %v308, 1
      %v521 = vsel %vm514, %v518, %v520
      %v522 = vrot.slane %v309, 1
      %v523 = vsel %vm514, %v520, %v522
      %v524 = vrot.slane %v310, 1
      %v525 = vsel %vm514, %v522, %v524
      %v526 = vrot.slane %v311, 1
      %v527 = vsel %vm514, %v524, %v526
      %v528 = vrot.slane %v312, 1
      %v529 = vsel %vm514, %v526, %v528
      %v530 = vrot.slane %v313, 1
      %v531 = vsel %vm514, %v528, %v530
      %v532 = vrot.slane %v314, 1
      %v533 = vsel %vm514, %v530, %v532
      %v534 = vrot.slane %v315, 1
      %v535 = vsel %vm514, %v532, %v534
      %v536 = vrot.slane %v316, 1
      %v537 = vsel %vm514, %v534, %v536
      %v538 = vrot.slane %v317, 1
      %v539 = vsel %vm514, %v536, %v538
      %v540 = vrot.slane %v318, 1
      %v541 = vsel %vm514, %v538, %v540
      %v542 = vrot.slane %v319, 1
      %v543 = vsel %vm514, %v540, %v542
      %v544 = vrot.slane %v320, 1
      %v545 = vsel %vm514, %v542, %v544
      %v546 = vrot.slane %v321, 1
      %v547 = vsel %vm514, %v544, %v546
      %v548 = vrot.slane %v322, 1
      %v549 = vsel %vm514, %v546, %v548
      %v550 = vrot.slane %v325, 1
      %v551 = vsel %vm514, %v548, %v550
      %552 = vrot.lane.b32.xlu0 %v517, 16
      %v553 = vpop.permute.xlu0 %552
      %554 = vrot.lane.b32.xlu0 %v519, 16
      %v555 = vpop.permute.xlu0 %554
      %556 = vrot.lane.b32.xlu0 %v521, 16
      %v557 = vpop.permute.xlu0 %556
      %558 = vrot.lane.b32.xlu0 %v523, 16
      %v559 = vpop.permute.xlu0 %558
      %560 = vrot.lane.b32.xlu0 %v525, 16
      %v561 = vpop.permute.xlu0 %560
      %562 = vrot.lane.b32.xlu0 %v527, 16
      %v563 = vpop.permute.xlu0 %562
      %564 = vrot.lane.b32.xlu0 %v529, 16
      %v565 = vpop.permute.xlu0 %564
      %566 = vrot.lane.b32.xlu0 %v531, 16
      %v567 = vpop.permute.xlu0 %566
      %568 = vrot.lane.b32.xlu0 %v533, 16
      %v569 = vpop.permute.xlu0 %568
      %570 = vrot.lane.b32.xlu0 %v535, 16
      %v571 = vpop.permute.xlu0 %570
      %572 = vrot.lane.b32.xlu0 %v537, 16
      %v573 = vpop.permute.xlu0 %572
      %574 = vrot.lane.b32.xlu0 %v539, 16
      %v575 = vpop.permute.xlu0 %574
      %576 = vrot.lane.b32.xlu0 %v541, 16
      %v577 = vpop.permute.xlu0 %576
      %578 = vrot.lane.b32.xlu0 %v543, 16
      %v579 = vpop.permute.xlu0 %578
      %580 = vrot.lane.b32.xlu0 %v545, 16
      %v581 = vpop.permute.xlu0 %580
      %582 = vrot.lane.b32.xlu0 %v547, 16
      %v583 = vpop.permute.xlu0 %582
      %584 = vrot.lane.b32.xlu0 %v549, 16
      %v585 = vpop.permute.xlu0 %584
      %586 = vrot.lane.b32.xlu0 %v551, 16
      %v587 = vpop.permute.xlu0 %586
      %vm588 = vcmask 64512
      %v590 = vsel %vm588, %v305, %v476
      %v592 = vsel %vm588, %v306, %v478
      %v594 = vsel %vm588, %v307, %v480
      %v596 = vsel %vm588, %v308, %v482
      %v598 = vsel %vm588, %v309, %v484
      %v600 = vsel %vm588, %v310, %v486
      %v602 = vsel %vm588, %v311, %v488
      %v604 = vsel %vm588, %v312, %v490
      %v606 = vsel %vm588, %v313, %v492
      %v608 = vsel %vm588, %v314, %v494
      %v610 = vsel %vm588, %v315, %v496
      %v612 = vsel %vm588, %v316, %v498
      %v614 = vsel %vm588, %v317, %v500
      %v616 = vsel %vm588, %v318, %v502
      %v618 = vsel %vm588, %v319, %v504
      %v620 = vsel %vm588, %v320, %v506
      %v622 = vsel %vm588, %v321, %v508
      %v624 = vsel %vm588, %v322, %v510
      %vm625 = vcmask 130048
      %v627 = vsel %vm625, %v590, %v553
      %v629 = vsel %vm625, %v592, %v555
      %v631 = vsel %vm625, %v594, %v557
      %v633 = vsel %vm625, %v596, %v559
      %v635 = vsel %vm625, %v598, %v561
      %v637 = vsel %vm625, %v600, %v563
      %v639 = vsel %vm625, %v602, %v565
      %v641 = vsel %vm625, %v604, %v567
      %v643 = vsel %vm625, %v606, %v569
      %v645 = vsel %vm625, %v608, %v571
      %v647 = vsel %vm625, %v610, %v573
      %v649 = vsel %vm625, %v612, %v575
      %v651 = vsel %vm625, %v614, %v577
      %v653 = vsel %vm625, %v616, %v579
      %v655 = vsel %vm625, %v618, %v581
      %v657 = vsel %vm625, %v620, %v583
      %v659 = vsel %vm625, %v622, %v585
      %v661 = vsel %vm625, %v624, %v587
      %v662 = vld [vmem:[%s1] sm:$0xf]
      %v663 = vld [vmem:[%s1 + $0x4] sm:$0xf]
      %v664 = vld [vmem:[%s1 + $0x8] sm:$0xf]
      %v665 = vld [vmem:[%s183 + $0x8] sm:$0xe]
      %v666 = vld [vmem:[%s183 + $0x90] sm:$0xf]
      %v667 = vld [vmem:[%s183 + $0x94] sm:$0xf]
      %v668 = vld [vmem:[%s183 + $0x98] sm:$0x1]
      %v669 = vld [vmem:[%s183 + $0x98] sm:$0x3]
      %v670 = vld [vmem:[%s183 + $0x8] sm:$0xc]
      %v675 = vunpack.c.l.b16 %v665
      %v676 = vunpack.c.l.b16 %v666
      %v677 = vunpack.c.l.b16 %v667
      %v678 = vunpack.c.l.b16 %v668
      %v679 = vpack.c.b16 %v272, %v675
      %v680 = vpack.c.b16 %v677, %v676
      %v681 = vpack.c.b16 %v678, %v678
      %v683 = vunpack.c.l.b16 %v669
      %v684 = vpack.c.b16 %v683, %v683
      %v686 = vshrl.u32 %v679, 16
      %v688 = vshll.u32 %v679, 16
      %v690 = vrot.slane %v688, 1
      %v691 = vor.u32 %v686, %v690
      %v692 = vsel %vm326, %v691, %v345
      %v694 = vshll.u32 %v680, 16
      %v696 = vrot.slane %v694, 1
      %v697 = vsel %vm326, %v469, %v696
      %v698 = vshrl.u32 %v680, 16
      %v700 = vor.u32 %v698, %v696
      %v702 = vshll.u32 %v684, 16
      %v704 = vrot.slane %v702, 1
      %v705 = vsel %vm326, %v700, %v704
      %v706 = vshrl.u32 %v684, 16
      %v708 = vor.u32 %v706, %v704
      %709 = vrot.lane.b32.xlu0 %v692, 8
      %v710 = vpop.permute.xlu0 %709
      %711 = vrot.lane.b32.xlu0 %v697, 8
      %v712 = vpop.permute.xlu0 %711
      %713 = vrot.lane.b32.xlu0 %v705, 8
      %v714 = vpop.permute.xlu0 %713
      %715 = vrot.lane.b32.xlu0 %v708, 8
      %v716 = vpop.permute.xlu0 %715
      %v718 = vunpack.c.l.b16 %v670
      %v719 = vpack.c.b16 %v272, %v718
      %v720 = vrot.slane %v719, 1
      %v721 = vsel %vm514, %v720, %v518
      %v722 = vrot.slane %v680, 1
      %v723 = vsel %vm514, %v548, %v722
      %v724 = vrot.slane %v684, 1
      %v725 = vsel %vm514, %v722, %v724
      %726 = vrot.lane.b32.xlu0 %v721, 16
      %v727 = vpop.permute.xlu0 %726
      %728 = vrot.lane.b32.xlu0 %v723, 16
      %v729 = vpop.permute.xlu0 %728
      %730 = vrot.lane.b32.xlu0 %v725, 16
      %v731 = vpop.permute.xlu0 %730
      %732 = vrot.lane.b32.xlu0 %v724, 16
      %v733 = vpop.permute.xlu0 %732
      %v735 = vsel %vm588, %v679, %v710
      %v737 = vsel %vm588, %v322, %v712
      %v739 = vsel %vm588, %v680, %v714
      %v742 = vsel %vm588, %v681, %v716
      %v744 = vsel %vm625, %v735, %v727
      %v746 = vsel %vm625, %v737, %v729
      %v748 = vsel %vm625, %v739, %v731
      %v750 = vsel %vm625, %v742, %v733
      %v751 = vld [vmem:[%s1 + $0xc] sm:$0xf]
      %v752 = vld [vmem:[%s1 + $0x10] sm:$0xf]
      %v753 = vld [vmem:[%s1 + $0x14] sm:$0xf]
      %v773 = vrot.slane %v744, 1
      %v774 = vrot.slane %v631, 1
      %v775 = vsel %vm514, %v773, %v774
      %v776 = vrot.slane %v633, 1
      %v777 = vsel %vm514, %v774, %v776
      %v778 = vrot.slane %v635, 1
      %v779 = vsel %vm514, %v776, %v778
      %v780 = vrot.slane %v637, 1
      %v781 = vsel %vm514, %v778, %v780
      %v782 = vrot.slane %v639, 1
      %v783 = vsel %vm514, %v780, %v782
      %v784 = vrot.slane %v641, 1
      %v785 = vsel %vm514, %v782, %v784
      %v786 = vrot.slane %v643, 1
      %v787 = vsel %vm514, %v784, %v786
      %v788 = vrot.slane %v645, 1
      %v789 = vsel %vm514, %v786, %v788
      %v790 = vrot.slane %v647, 1
      %v791 = vsel %vm514, %v788, %v790
      %v792 = vrot.slane %v649, 1
      %v793 = vsel %vm514, %v790, %v792
      %v794 = vrot.slane %v651, 1
      %v795 = vsel %vm514, %v792, %v794
      %v796 = vrot.slane %v653, 1
      %v797 = vsel %vm514, %v794, %v796
      %v798 = vrot.slane %v655, 1
      %v799 = vsel %vm514, %v796, %v798
      %v800 = vrot.slane %v657, 1
      %v801 = vsel %vm514, %v798, %v800
      %v802 = vrot.slane %v659, 1
      %v803 = vsel %vm514, %v800, %v802
      %v804 = vrot.slane %v746, 1
      %v805 = vsel %vm514, %v802, %v804
      %v806 = vrot.slane %v748, 1
      %v807 = vsel %vm514, %v804, %v806
      %v808 = vrot.slane %v750, 1
      %v809 = vsel %vm514, %v806, %v808
      %v813 = vunpack.c.l.b16 %v751
      %v814 = vunpack.c.l.b16 %v752
      %v815 = vunpack.c.l.b16 %v753
      %v816 = vpack.c.b16 %v814, %v813
      %v817 = vpack.c.b16 %v815, %v815
      %vm819 = vcmask 195584
      %v821 = vsel %vm819, %v775, 0
      %v824 = vsel %vm819, %v777, 0
      %v827 = vsel %vm819, %v779, 0
      %v830 = vsel %vm819, %v781, 0
      %v833 = vsel %vm819, %v783, 0
      %v836 = vsel %vm819, %v785, 0
      %v839 = vsel %vm819, %v787, 0
      %v842 = vsel %vm819, %v789, 0
      %v845 = vsel %vm819, %v791, 0
      %v848 = vsel %vm819, %v793, 0
      %v851 = vsel %vm819, %v795, 0
      %v854 = vsel %vm819, %v797, 0
      %v857 = vsel %vm819, %v799, 0
      %v860 = vsel %vm819, %v801, 0
      %v863 = vsel %vm819, %v803, 0
      %v866 = vsel %vm819, %v805, 0
      %v869 = vsel %vm819, %v807, 0
      %v872 = vsel %vm819, %v809, 0
      %vm874 = vcmask 1043456
      %v876 = vsel %vm874, %v817, 0
      %878 = vmatprep.subr.bf16.mxu0 0
      %879 = vmatpush1.bf16.msra.mxu0 0
      %880 = vmatprep.subr.bf16.mxu0 0
      %881 = vmatpush1.bf16.msra.mxu0 0
      %882 = vmatprep.subr.bf16.mxu0 0
      %883 = vmatpush1.bf16.msra.mxu0 0
      %884 = vmatprep.subr.bf16.mxu0 0
      %885 = vmatpush1.bf16.msra.mxu0 0
      %886 = vmatprep.subr.bf16.mxu0 0
      %887 = vmatpush1.bf16.msra.mxu0 0
      %888 = vmatprep.subr.bf16.mxu0 0
      %889 = vmatpush1.bf16.msra.mxu0 0
      %890 = vmatprep.subr.bf16.mxu0 0
      %891 = vmatpush1.bf16.msra.mxu0 %v876
      %892 = vmatprep.subr.bf16.mxu0 0
      %893 = vmatpush1.bf16.msra.mxu0 %v816
      %894 = vmatprep.subr.bf16.mxu0 0
      %895 = vmatpush2.bf16.msra.mxu0 0
      %896 = vmatprep.subr.bf16.mxu0 0
      %897 = vmatpush2.bf16.msra.mxu0 0
      %898 = vmatprep.subr.bf16.mxu0 0
      %899 = vmatpush2.bf16.msra.mxu0 0
      %900 = vmatprep.subr.bf16.mxu0 0
      %901 = vmatpush2.bf16.msra.mxu0 0
      %902 = vmatprep.subr.bf16.mxu0 0
      %903 = vmatpush2.bf16.msra.mxu0 0
      %904 = vmatprep.subr.bf16.mxu0 0
      %905 = vmatpush2.bf16.msra.mxu0 0
      %906 = vmatprep.subr.bf16.mxu0 0
      %907 = vmatpush2.bf16.msra.mxu0 0
      %908 = vmatprep.subr.bf16.mxu0 0
      %909 = vmatpush2.bf16.msra.mxu0 0
      %910 = vmatprep.mubr.bf16.mxu0 0
      %911 = vmatmul.mubr.bf16.gmra.mxu0 %v821
      %v912 = vpop.f32.mrf.mxu0
      %v913 = vadd.f32 0.0, %v912
      %v914 = vpop.f32.mrf.mxu0
      %v915 = vpop.f32.mrf.mxu0
      %v916 = vadd.f32 0.0, %v915
      %v917 = vpop.f32.mrf.mxu0
      %918 = vmatprep.mubr.bf16.mxu0 0
      %919 = vmatmul.mubr.bf16.gmra.mxu0 %v824
      %v920 = vpop.f32.mrf.mxu0
      %v921 = vadd.f32 0.0, %v920
      %v922 = vpop.f32.mrf.mxu0
      %v923 = vpop.f32.mrf.mxu0
      %v924 = vadd.f32 0.0, %v923
      %v925 = vpop.f32.mrf.mxu0
      %926 = vmatprep.mubr.bf16.mxu0 0
      %927 = vmatmul.mubr.bf16.gmra.mxu0 %v827
      %v928 = vpop.f32.mrf.mxu0
      %v929 = vadd.f32 0.0, %v928
      %v930 = vpop.f32.mrf.mxu0
      %v931 = vpop.f32.mrf.mxu0
      %v932 = vadd.f32 0.0, %v931
      %v933 = vpop.f32.mrf.mxu0
      %934 = vmatprep.mubr.bf16.mxu0 0
      %935 = vmatmul.mubr.bf16.gmra.mxu0 %v830
      %v936 = vpop.f32.mrf.mxu0
      %v937 = vadd.f32 0.0, %v936
      %v938 = vpop.f32.mrf.mxu0
      %v939 = vpop.f32.mrf.mxu0
      %v940 = vadd.f32 0.0, %v939
      %v941 = vpop.f32.mrf.mxu0
      %942 = vmatprep.mubr.bf16.mxu0 0
      %943 = vmatmul.mubr.bf16.gmra.mxu0 %v833
      %v944 = vpop.f32.mrf.mxu0
      %v945 = vadd.f32 0.0, %v944
      %v946 = vpop.f32.mrf.mxu0
      %v947 = vpop.f32.mrf.mxu0
      %v948 = vadd.f32 0.0, %v947
      %v949 = vpop.f32.mrf.mxu0
      %950 = vmatprep.mubr.bf16.mxu0 0
      %951 = vmatmul.mubr.bf16.gmra.mxu0 %v836
      %v952 = vpop.f32.mrf.mxu0
      %v953 = vadd.f32 0.0, %v952
      %v954 = vpop.f32.mrf.mxu0
      %v955 = vpop.f32.mrf.mxu0
      %v956 = vadd.f32 0.0, %v955
      %v957 = vpop.f32.mrf.mxu0
      %958 = vmatprep.mubr.bf16.mxu0 0
      %959 = vmatmul.mubr.bf16.gmra.mxu0 %v839
      %v960 = vpop.f32.mrf.mxu0
      %v961 = vadd.f32 0.0, %v960
      %v962 = vpop.f32.mrf.mxu0
      %v963 = vpop.f32.mrf.mxu0
      %v964 = vadd.f32 0.0, %v963
      %v965 = vpop.f32.mrf.mxu0
      %966 = vmatprep.mubr.bf16.mxu0 0
      %967 = vmatmul.mubr.bf16.gmra.mxu0 %v842
      %v968 = vpop.f32.mrf.mxu0
      %v969 = vadd.f32 0.0, %v968
      %v970 = vpop.f32.mrf.mxu0
      %v971 = vpop.f32.mrf.mxu0
      %v972 = vadd.f32 0.0, %v971
      %v973 = vpop.f32.mrf.mxu0
      %974 = vmatprep.mubr.bf16.mxu0 0
      %975 = vmatmul.mubr.bf16.gmra.mxu0 %v845
      %v976 = vpop.f32.mrf.mxu0
      %v977 = vadd.f32 0.0, %v976
      %v978 = vpop.f32.mrf.mxu0
      %v979 = vpop.f32.mrf.mxu0
      %v980 = vadd.f32 0.0, %v979
      %v981 = vpop.f32.mrf.mxu0
      %982 = vmatprep.mubr.bf16.mxu0 0
      %983 = vmatmul.mubr.bf16.gmra.mxu0 %v848
      %v984 = vpop.f32.mrf.mxu0
      %v985 = vadd.f32 0.0, %v984
      %v986 = vpop.f32.mrf.mxu0
      %v987 = vpop.f32.mrf.mxu0
      %v988 = vadd.f32 0.0, %v987
      %v989 = vpop.f32.mrf.mxu0
      %990 = vmatprep.mubr.bf16.mxu0 0
      %991 = vmatmul.mubr.bf16.gmra.mxu0 %v851
      %v992 = vpop.f32.mrf.mxu0
      %v993 = vadd.f32 0.0, %v992
      %v994 = vpop.f32.mrf.mxu0
      %v995 = vpop.f32.mrf.mxu0
      %v996 = vadd.f32 0.0, %v995
      %v997 = vpop.f32.mrf.mxu0
      %998 = vmatprep.mubr.bf16.mxu0 0
      %999 = vmatmul.mubr.bf16.gmra.mxu0 %v854
      %v1000 = vpop.f32.mrf.mxu0
      %v1001 = vadd.f32 0.0, %v1000
      %v1002 = vpop.f32.mrf.mxu0
      %v1003 = vpop.f32.mrf.mxu0
      %v1004 = vadd.f32 0.0, %v1003
      %v1005 = vpop.f32.mrf.mxu0
      %1006 = vmatprep.mubr.bf16.mxu0 0
      %1007 = vmatmul.mubr.bf16.gmra.mxu0 %v857
      %v1008 = vpop.f32.mrf.mxu0
      %v1009 = vadd.f32 0.0, %v1008
      %v1010 = vpop.f32.mrf.mxu0
      %v1011 = vpop.f32.mrf.mxu0
      %v1012 = vadd.f32 0.0, %v1011
      %v1013 = vpop.f32.mrf.mxu0
      %1014 = vmatprep.mubr.bf16.mxu0 0
      %1015 = vmatmul.mubr.bf16.gmra.mxu0 %v860
      %v1016 = vpop.f32.mrf.mxu0
      %v1017 = vadd.f32 0.0, %v1016
      %v1018 = vpop.f32.mrf.mxu0
      %v1019 = vpop.f32.mrf.mxu0
      %v1020 = vadd.f32 0.0, %v1019
      %v1021 = vpop.f32.mrf.mxu0
      %1022 = vmatprep.mubr.bf16.mxu0 0
      %1023 = vmatmul.mubr.bf16.gmra.mxu0 %v863
      %v1024 = vpop.f32.mrf.mxu0
      %v1025 = vadd.f32 0.0, %v1024
      %v1026 = vpop.f32.mrf.mxu0
      %v1027 = vpop.f32.mrf.mxu0
      %v1028 = vadd.f32 0.0, %v1027
      %v1029 = vpop.f32.mrf.mxu0
      %1030 = vmatprep.mubr.bf16.mxu0 0
      %1031 = vmatmul.mubr.bf16.gmra.mxu0 %v866
      %v1032 = vpop.f32.mrf.mxu0
      %v1033 = vadd.f32 0.0, %v1032
      %v1034 = vpop.f32.mrf.mxu0
      %v1035 = vpop.f32.mrf.mxu0
      %v1036 = vadd.f32 0.0, %v1035
      %v1037 = vpop.f32.mrf.mxu0
      %1038 = vmatprep.mubr.bf16.mxu0 0
      %1039 = vmatmul.mubr.bf16.gmra.mxu0 %v869
      %v1040 = vpop.f32.mrf.mxu0
      %v1041 = vadd.f32 0.0, %v1040
      %v1042 = vpop.f32.mrf.mxu0
      %v1043 = vpop.f32.mrf.mxu0
      %v1044 = vadd.f32 0.0, %v1043
      %v1045 = vpop.f32.mrf.mxu0
      %1046 = vmatprep.mubr.bf16.mxu0 0
      %1047 = vmatmul.mubr.bf16.gmra.mxu0 %v872
      %v1048 = vpop.f32.mrf.mxu0
      %v1049 = vadd.f32 0.0, %v1048
      %v1050 = vpop.f32.mrf.mxu0
      %v1051 = vpop.f32.mrf.mxu0
      %v1052 = vadd.f32 0.0, %v1051
      %v1053 = vpop.f32.mrf.mxu0
      %1054 = vdwg.mxu0
      %v1058 = vunpack.c.l.b16 %v662
      %v1059 = vunpack.c.l.b16 %v663
      %v1060 = vunpack.c.l.b16 %v664
      %v1061 = vpack.c.b16 %v1059, %v1058
      %v1062 = vpack.c.b16 %v1060, %v1060
      %v1064 = vsel %vm819, %v627, 0
      %v1066 = vsel %vm819, %v629, 0
      %v1068 = vsel %vm819, %v631, 0
      %v1070 = vsel %vm819, %v633, 0
      %v1072 = vsel %vm819, %v635, 0
      %v1074 = vsel %vm819, %v637, 0
      %v1076 = vsel %vm819, %v639, 0
      %v1078 = vsel %vm819, %v641, 0
      %v1080 = vsel %vm819, %v643, 0
      %v1082 = vsel %vm819, %v645, 0
      %v1084 = vsel %vm819, %v647, 0
      %v1086 = vsel %vm819, %v649, 0
      %v1088 = vsel %vm819, %v651, 0
      %v1090 = vsel %vm819, %v653, 0
      %v1092 = vsel %vm819, %v655, 0
      %v1094 = vsel %vm819, %v657, 0
      %v1096 = vsel %vm819, %v659, 0
      %v1098 = vsel %vm819, %v661, 0
      %v1101 = vsel %vm874, %v1062, 0
      %1103 = vmatprep.subr.bf16.mxu0 0
      %1104 = vmatpush1.bf16.msra.mxu0 0
      %1105 = vmatprep.subr.bf16.mxu0 0
      %1106 = vmatpush1.bf16.msra.mxu0 0
      %1107 = vmatprep.subr.bf16.mxu0 0
      %1108 = vmatpush1.bf16.msra.mxu0 0
      %1109 = vmatprep.subr.bf16.mxu0 0
      %1110 = vmatpush1.bf16.msra.mxu0 0
      %1111 = vmatprep.subr.bf16.mxu0 0
      %1112 = vmatpush1.bf16.msra.mxu0 0
      %1113 = vmatprep.subr.bf16.mxu0 0
      %1114 = vmatpush1.bf16.msra.mxu0 0
      %1115 = vmatprep.subr.bf16.mxu0 0
      %1116 = vmatpush1.bf16.msra.mxu0 %v1101
      %1117 = vmatprep.subr.bf16.mxu0 0
      %1118 = vmatpush1.bf16.msra.mxu0 %v1061
      %1119 = vmatprep.subr.bf16.mxu0 0
      %1120 = vmatpush2.bf16.msra.mxu0 0
      %1121 = vmatprep.subr.bf16.mxu0 0
      %1122 = vmatpush2.bf16.msra.mxu0 0
      %1123 = vmatprep.subr.bf16.mxu0 0
      %1124 = vmatpush2.bf16.msra.mxu0 0
      %1125 = vmatprep.subr.bf16.mxu0 0
      %1126 = vmatpush2.bf16.msra.mxu0 0
      %1127 = vmatprep.subr.bf16.mxu0 0
      %1128 = vmatpush2.bf16.msra.mxu0 0
      %1129 = vmatprep.subr.bf16.mxu0 0
      %1130 = vmatpush2.bf16.msra.mxu0 0
      %1131 = vmatprep.subr.bf16.mxu0 0
      %1132 = vmatpush2.bf16.msra.mxu0 0
      %1133 = vmatprep.subr.bf16.mxu0 0
      %1134 = vmatpush2.bf16.msra.mxu0 0
      %1135 = vmatprep.mubr.bf16.mxu0 0
      %1136 = vmatmul.mubr.bf16.gmra.mxu0 %v1064
      %v1137 = vpop.f32.mrf.mxu0
      %v1138 = vadd.f32 %v913, %v1137
      %v1139 = vpop.f32.mrf.mxu0
      %v1140 = vpop.f32.mrf.mxu0
      %v1141 = vadd.f32 %v916, %v1140
      %v1142 = vpop.f32.mrf.mxu0
      %1143 = vmatprep.mubr.bf16.mxu0 0
      %1144 = vmatmul.mubr.bf16.gmra.mxu0 %v1066
      %v1145 = vpop.f32.mrf.mxu0
      %v1146 = vadd.f32 %v921, %v1145
      %v1147 = vpop.f32.mrf.mxu0
      %v1148 = vpop.f32.mrf.mxu0
      %v1149 = vadd.f32 %v924, %v1148
      %v1150 = vpop.f32.mrf.mxu0
      %1151 = vmatprep.mubr.bf16.mxu0 0
      %1152 = vmatmul.mubr.bf16.gmra.mxu0 %v1068
      %v1153 = vpop.f32.mrf.mxu0
      %v1154 = vadd.f32 %v929, %v1153
      %v1155 = vpop.f32.mrf.mxu0
      %v1156 = vpop.f32.mrf.mxu0
      %v1157 = vadd.f32 %v932, %v1156
      %v1158 = vpop.f32.mrf.mxu0
      %1159 = vmatprep.mubr.bf16.mxu0 0
      %1160 = vmatmul.mubr.bf16.gmra.mxu0 %v1070
      %v1161 = vpop.f32.mrf.mxu0
      %v1162 = vadd.f32 %v937, %v1161
      %v1163 = vpop.f32.mrf.mxu0
      %v1164 = vpop.f32.mrf.mxu0
      %v1165 = vadd.f32 %v940, %v1164
      %v1166 = vpop.f32.mrf.mxu0
      %1167 = vmatprep.mubr.bf16.mxu0 0
      %1168 = vmatmul.mubr.bf16.gmra.mxu0 %v1072
      %v1169 = vpop.f32.mrf.mxu0
      %v1170 = vadd.f32 %v945, %v1169
      %v1171 = vpop.f32.mrf.mxu0
      %v1172 = vpop.f32.mrf.mxu0
      %v1173 = vadd.f32 %v948, %v1172
      %v1174 = vpop.f32.mrf.mxu0
      %1175 = vmatprep.mubr.bf16.mxu0 0
      %1176 = vmatmul.mubr.bf16.gmra.mxu0 %v1074
      %v1177 = vpop.f32.mrf.mxu0
      %v1178 = vadd.f32 %v953, %v1177
      %v1179 = vpop.f32.mrf.mxu0
      %v1180 = vpop.f32.mrf.mxu0
      %v1181 = vadd.f32 %v956, %v1180
      %v1182 = vpop.f32.mrf.mxu0
      %1183 = vmatprep.mubr.bf16.mxu0 0
      %1184 = vmatmul.mubr.bf16.gmra.mxu0 %v1076
      %v1185 = vpop.f32.mrf.mxu0
      %v1186 = vadd.f32 %v961, %v1185
      %v1187 = vpop.f32.mrf.mxu0
      %v1188 = vpop.f32.mrf.mxu0
      %v1189 = vadd.f32 %v964, %v1188
      %v1190 = vpop.f32.mrf.mxu0
      %1191 = vmatprep.mubr.bf16.mxu0 0
      %1192 = vmatmul.mubr.bf16.gmra.mxu0 %v1078
      %v1193 = vpop.f32.mrf.mxu0
      %v1194 = vadd.f32 %v969, %v1193
      %v1195 = vpop.f32.mrf.mxu0
      %v1196 = vpop.f32.mrf.mxu0
      %v1197 = vadd.f32 %v972, %v1196
      %v1198 = vpop.f32.mrf.mxu0
      %1199 = vmatprep.mubr.bf16.mxu0 0
      %1200 = vmatmul.mubr.bf16.gmra.mxu0 %v1080
      %v1201 = vpop.f32.mrf.mxu0
      %v1202 = vadd.f32 %v977, %v1201
      %v1203 = vpop.f32.mrf.mxu0
      %v1204 = vpop.f32.mrf.mxu0
      %v1205 = vadd.f32 %v980, %v1204
      %v1206 = vpop.f32.mrf.mxu0
      %1207 = vmatprep.mubr.bf16.mxu0 0
      %1208 = vmatmul.mubr.bf16.gmra.mxu0 %v1082
      %v1209 = vpop.f32.mrf.mxu0
      %v1210 = vadd.f32 %v985, %v1209
      %v1211 = vpop.f32.mrf.mxu0
      %v1212 = vpop.f32.mrf.mxu0
      %v1213 = vadd.f32 %v988, %v1212
      %v1214 = vpop.f32.mrf.mxu0
      %1215 = vmatprep.mubr.bf16.mxu0 0
      %1216 = vmatmul.mubr.bf16.gmra.mxu0 %v1084
      %v1217 = vpop.f32.mrf.mxu0
      %v1218 = vadd.f32 %v993, %v1217
      %v1219 = vpop.f32.mrf.mxu0
      %v1220 = vpop.f32.mrf.mxu0
      %v1221 = vadd.f32 %v996, %v1220
      %v1222 = vpop.f32.mrf.mxu0
      %1223 = vmatprep.mubr.bf16.mxu0 0
      %1224 = vmatmul.mubr.bf16.gmra.mxu0 %v1086
      %v1225 = vpop.f32.mrf.mxu0
      %v1226 = vadd.f32 %v1001, %v1225
      %v1227 = vpop.f32.mrf.mxu0
      %v1228 = vpop.f32.mrf.mxu0
      %v1229 = vadd.f32 %v1004, %v1228
      %v1230 = vpop.f32.mrf.mxu0
      %1231 = vmatprep.mubr.bf16.mxu0 0
      %1232 = vmatmul.mubr.bf16.gmra.mxu0 %v1088
      %v1233 = vpop.f32.mrf.mxu0
      %v1234 = vadd.f32 %v1009, %v1233
      %v1235 = vpop.f32.mrf.mxu0
      %v1236 = vpop.f32.mrf.mxu0
      %v1237 = vadd.f32 %v1012, %v1236
      %v1238 = vpop.f32.mrf.mxu0
      %1239 = vmatprep.mubr.bf16.mxu0 0
      %1240 = vmatmul.mubr.bf16.gmra.mxu0 %v1090
      %v1241 = vpop.f32.mrf.mxu0
      %v1242 = vadd.f32 %v1017, %v1241
      %v1243 = vpop.f32.mrf.mxu0
      %v1244 = vpop.f32.mrf.mxu0
      %v1245 = vadd.f32 %v1020, %v1244
      %v1246 = vpop.f32.mrf.mxu0
      %1247 = vmatprep.mubr.bf16.mxu0 0
      %1248 = vmatmul.mubr.bf16.gmra.mxu0 %v1092
      %v1249 = vpop.f32.mrf.mxu0
      %v1250 = vadd.f32 %v1025, %v1249
      %v1251 = vpop.f32.mrf.mxu0
      %v1252 = vpop.f32.mrf.mxu0
      %v1253 = vadd.f32 %v1028, %v1252
      %v1254 = vpop.f32.mrf.mxu0
      %1255 = vmatprep.mubr.bf16.mxu0 0
      %1256 = vmatmul.mubr.bf16.gmra.mxu0 %v1094
      %v1257 = vpop.f32.mrf.mxu0
      %v1258 = vadd.f32 %v1033, %v1257
      %v1259 = vpop.f32.mrf.mxu0
      %v1260 = vpop.f32.mrf.mxu0
      %v1261 = vadd.f32 %v1036, %v1260
      %v1262 = vpop.f32.mrf.mxu0
      %1263 = vmatprep.mubr.bf16.mxu0 0
      %1264 = vmatmul.mubr.bf16.gmra.mxu0 %v1096
      %v1265 = vpop.f32.mrf.mxu0
      %v1266 = vadd.f32 %v1041, %v1265
      %v1267 = vpop.f32.mrf.mxu0
      %v1268 = vpop.f32.mrf.mxu0
      %v1269 = vadd.f32 %v1044, %v1268
      %v1270 = vpop.f32.mrf.mxu0
      %1271 = vmatprep.mubr.bf16.mxu0 0
      %1272 = vmatmul.mubr.bf16.gmra.mxu0 %v1098
      %v1273 = vpop.f32.mrf.mxu0
      %v1274 = vadd.f32 %v1049, %v1273
      %v1275 = vpop.f32.mrf.mxu0
      %v1276 = vpop.f32.mrf.mxu0
      %v1277 = vadd.f32 %v1052, %v1276
      %v1278 = vpop.f32.mrf.mxu0
      %1279 = vdwg.mxu0
      %v1280 = vld [vmem:[%s183 + $0x10] sm:$0xc]
      %v1281 = vld [vmem:[%s183 + $0x14] sm:$0xf]
      %v1282 = vld [vmem:[%s183 + $0x18] sm:$0xf]
      %v1283 = vld [vmem:[%s183 + $0x1c] sm:$0xf]
      %v1284 = vld [vmem:[%s183 + $0x20] sm:$0xf]
      %v1285 = vld [vmem:[%s183 + $0x24] sm:$0xf]
      %v1286 = vld [vmem:[%s183 + $0x28] sm:$0xf]
      %v1287 = vld [vmem:[%s183 + $0x2c] sm:$0xf]
      %v1288 = vld [vmem:[%s183 + $0x30] sm:$0xf]
      %v1289 = vld [vmem:[%s183 + $0x34] sm:$0xf]
      %v1290 = vld [vmem:[%s183 + $0x38] sm:$0xf]
      %v1291 = vld [vmem:[%s183 + $0x3c] sm:$0xf]
      %v1292 = vld [vmem:[%s183 + $0x40] sm:$0xf]
      %v1293 = vld [vmem:[%s183 + $0x44] sm:$0xf]
      %v1294 = vld [vmem:[%s183 + $0x48] sm:$0xf]
      %v1295 = vld [vmem:[%s183 + $0x4c] sm:$0xf]
      %v1296 = vld [vmem:[%s183 + $0x50] sm:$0xf]
      %v1297 = vld [vmem:[%s183 + $0x54] sm:$0xf]
      %v1298 = vld [vmem:[%s183 + $0x58] sm:$0xf]
      %v1299 = vld [vmem:[%s183 + $0x5c] sm:$0xf]
      %v1300 = vld [vmem:[%s183 + $0x60] sm:$0xf]
      %v1301 = vld [vmem:[%s183 + $0x64] sm:$0xf]
      %v1302 = vld [vmem:[%s183 + $0x68] sm:$0xf]
      %v1303 = vld [vmem:[%s183 + $0x6c] sm:$0xf]
      %v1304 = vld [vmem:[%s183 + $0x70] sm:$0xf]
      %v1305 = vld [vmem:[%s183 + $0x74] sm:$0xf]
      %v1306 = vld [vmem:[%s183 + $0x78] sm:$0xf]
      %v1307 = vld [vmem:[%s183 + $0x7c] sm:$0xf]
      %v1308 = vld [vmem:[%s183 + $0x80] sm:$0xf]
      %v1309 = vld [vmem:[%s183 + $0x84] sm:$0xf]
      %v1310 = vld [vmem:[%s183 + $0x88] sm:$0xf]
      %v1311 = vld [vmem:[%s183 + $0x8c] sm:$0xf]
      %v1312 = vld [vmem:[%s183 + $0x90] sm:$0xf]
      %v1313 = vld [vmem:[%s183 + $0x94] sm:$0xf]
      %v1314 = vld [vmem:[%s183 + $0x98] sm:$0xf]
      %v1315 = vld [vmem:[%s183 + $0x9c] sm:$0xf]
      %v1316 = vld [vmem:[%s183 + $0xa0] sm:$0x3]
      %v1317 = vld [vmem:[%s183 + $0xa0] sm:$0x7]
      %v1318 = vld [vmem:[%s183 + $0x10] sm:$0x8]
      %v1356 = vunpack.c.l.b16 %v1280
      %v1357 = vunpack.c.l.b16 %v1281
      %v1358 = vunpack.c.l.b16 %v1282
      %v1359 = vunpack.c.l.b16 %v1283
      %v1360 = vunpack.c.l.b16 %v1284
      %v1361 = vunpack.c.l.b16 %v1285
      %v1362 = vunpack.c.l.b16 %v1286
      %v1363 = vunpack.c.l.b16 %v1287
      %v1364 = vunpack.c.l.b16 %v1288
      %v1365 = vunpack.c.l.b16 %v1289
      %v1366 = vunpack.c.l.b16 %v1290
      %v1367 = vunpack.c.l.b16 %v1291
      %v1368 = vunpack.c.l.b16 %v1292
      %v1369 = vunpack.c.l.b16 %v1293
      %v1370 = vunpack.c.l.b16 %v1294
      %v1371 = vunpack.c.l.b16 %v1295
      %v1372 = vunpack.c.l.b16 %v1296
      %v1373 = vunpack.c.l.b16 %v1297
      %v1374 = vunpack.c.l.b16 %v1298
      %v1375 = vunpack.c.l.b16 %v1299
      %v1376 = vunpack.c.l.b16 %v1300
      %v1377 = vunpack.c.l.b16 %v1301
      %v1378 = vunpack.c.l.b16 %v1302
      %v1379 = vunpack.c.l.b16 %v1303
      %v1380 = vunpack.c.l.b16 %v1304
      %v1381 = vunpack.c.l.b16 %v1305
      %v1382 = vunpack.c.l.b16 %v1306
      %v1383 = vunpack.c.l.b16 %v1307
      %v1384 = vunpack.c.l.b16 %v1308
      %v1385 = vunpack.c.l.b16 %v1309
      %v1386 = vunpack.c.l.b16 %v1310
      %v1387 = vunpack.c.l.b16 %v1311
      %v1388 = vunpack.c.l.b16 %v1312
      %v1389 = vunpack.c.l.b16 %v1313
      %v1390 = vunpack.c.l.b16 %v1314
      %v1391 = vunpack.c.l.b16 %v1315
      %v1392 = vunpack.c.l.b16 %v1316
      %v1393 = vpack.c.b16 %v1357, %v1356
      %v1394 = vpack.c.b16 %v1359, %v1358
      %v1395 = vpack.c.b16 %v1361, %v1360
      %v1396 = vpack.c.b16 %v1363, %v1362
      %v1397 = vpack.c.b16 %v1365, %v1364
      %v1398 = vpack.c.b16 %v1367, %v1366
      %v1399 = vpack.c.b16 %v1369, %v1368
      %v1400 = vpack.c.b16 %v1371, %v1370
      %v1401 = vpack.c.b16 %v1373, %v1372
      %v1402 = vpack.c.b16 %v1375, %v1374
      %v1403 = vpack.c.b16 %v1377, %v1376
      %v1404 = vpack.c.b16 %v1379, %v1378
      %v1405 = vpack.c.b16 %v1381, %v1380
      %v1406 = vpack.c.b16 %v1383, %v1382
      %v1407 = vpack.c.b16 %v1385, %v1384
      %v1408 = vpack.c.b16 %v1387, %v1386
      %v1409 = vpack.c.b16 %v1389, %v1388
      %v1410 = vpack.c.b16 %v1391, %v1390
      %v1411 = vpack.c.b16 %v1392, %v1392
      %v1413 = vunpack.c.l.b16 %v1317
      %v1414 = vpack.c.b16 %v1413, %v1413
      %v1416 = vshrl.u32 %v1393, 16
      %v1418 = vshll.u32 %v1393, 16
      %v1420 = vrot.slane %v1418, 1
      %v1421 = vor.u32 %v1416, %v1420
      %v1423 = vshll.u32 %v1394, 16
      %v1425 = vrot.slane %v1423, 1
      %v1426 = vsel %vm326, %v1421, %v1425
      %v1427 = vshrl.u32 %v1394, 16
      %v1429 = vor.u32 %v1427, %v1425
      %v1431 = vshll.u32 %v1395, 16
      %v1433 = vrot.slane %v1431, 1
      %v1434 = vsel %vm326, %v1429, %v1433
      %v1435 = vshrl.u32 %v1395, 16
      %v1437 = vor.u32 %v1435, %v1433
      %v1439 = vshll.u32 %v1396, 16
      %v1441 = vrot.slane %v1439, 1
      %v1442 = vsel %vm326, %v1437, %v1441
      %v1443 = vshrl.u32 %v1396, 16
      %v1445 = vor.u32 %v1443, %v1441
      %v1447 = vshll.u32 %v1397, 16
      %v1449 = vrot.slane %v1447, 1
      %v1450 = vsel %vm326, %v1445, %v1449
      %v1451 = vshrl.u32 %v1397, 16
      %v1453 = vor.u32 %v1451, %v1449
      %v1455 = vshll.u32 %v1398, 16
      %v1457 = vrot.slane %v1455, 1
      %v1458 = vsel %vm326, %v1453, %v1457
      %v1459 = vshrl.u32 %v1398, 16
      %v1461 = vor.u32 %v1459, %v1457
      %v1463 = vshll.u32 %v1399, 16
      %v1465 = vrot.slane %v1463, 1
      %v1466 = vsel %vm326, %v1461, %v1465
      %v1467 = vshrl.u32 %v1399, 16
      %v1469 = vor.u32 %v1467, %v1465
      %v1471 = vshll.u32 %v1400, 16
      %v1473 = vrot.slane %v1471, 1
      %v1474 = vsel %vm326, %v1469, %v1473
      %v1475 = vshrl.u32 %v1400, 16
      %v1477 = vor.u32 %v1475, %v1473
      %v1479 = vshll.u32 %v1401, 16
      %v1481 = vrot.slane %v1479, 1
      %v1482 = vsel %vm326, %v1477, %v1481
      %v1483 = vshrl.u32 %v1401, 16
      %v1485 = vor.u32 %v1483, %v1481
      %v1487 = vshll.u32 %v1402, 16
      %v1489 = vrot.slane %v1487, 1
      %v1490 = vsel %vm326, %v1485, %v1489
      %v1491 = vshrl.u32 %v1402, 16
      %v1493 = vor.u32 %v1491, %v1489
      %v1495 = vshll.u32 %v1403, 16
      %v1497 = vrot.slane %v1495, 1
      %v1498 = vsel %vm326, %v1493, %v1497
      %v1499 = vshrl.u32 %v1403, 16
      %v1501 = vor.u32 %v1499, %v1497
      %v1503 = vshll.u32 %v1404, 16
      %v1505 = vrot.slane %v1503, 1
      %v1506 = vsel %vm326, %v1501, %v1505
      %v1507 = vshrl.u32 %v1404, 16
      %v1509 = vor.u32 %v1507, %v1505
      %v1511 = vshll.u32 %v1405, 16
      %v1513 = vrot.slane %v1511, 1
      %v1514 = vsel %vm326, %v1509, %v1513
      %v1515 = vshrl.u32 %v1405, 16
      %v1517 = vor.u32 %v1515, %v1513
      %v1519 = vshll.u32 %v1406, 16
      %v1521 = vrot.slane %v1519, 1
      %v1522 = vsel %vm326, %v1517, %v1521
      %v1523 = vshrl.u32 %v1406, 16
      %v1525 = vor.u32 %v1523, %v1521
      %v1527 = vshll.u32 %v1407, 16
      %v1529 = vrot.slane %v1527, 1
      %v1530 = vsel %vm326, %v1525, %v1529
      %v1531 = vshrl.u32 %v1407, 16
      %v1533 = vor.u32 %v1531, %v1529
      %v1535 = vshll.u32 %v1408, 16
      %v1537 = vrot.slane %v1535, 1
      %v1538 = vsel %vm326, %v1533, %v1537
      %v1539 = vshrl.u32 %v1408, 16
      %v1541 = vor.u32 %v1539, %v1537
      %v1543 = vshll.u32 %v1409, 16
      %v1545 = vrot.slane %v1543, 1
      %v1546 = vsel %vm326, %v1541, %v1545
      %v1547 = vshrl.u32 %v1409, 16
      %v1549 = vor.u32 %v1547, %v1545
      %v1551 = vshll.u32 %v1410, 16
      %v1553 = vrot.slane %v1551, 1
      %v1554 = vsel %vm326, %v1549, %v1553
      %v1555 = vshrl.u32 %v1410, 16
      %v1557 = vor.u32 %v1555, %v1553
      %v1559 = vshll.u32 %v1414, 16
      %v1561 = vrot.slane %v1559, 1
      %v1562 = vsel %vm326, %v1557, %v1561
      %v1563 = vshrl.u32 %v1414, 16
      %v1565 = vor.u32 %v1563, %v1561
      %1566 = vrot.lane.b32.xlu0 %v1426, 8
      %v1567 = vpop.permute.xlu0 %1566
      %1568 = vrot.lane.b32.xlu0 %v1434, 8
      %v1569 = vpop.permute.xlu0 %1568
      %1570 = vrot.lane.b32.xlu0 %v1442, 8
      %v1571 = vpop.permute.xlu0 %1570
      %1572 = vrot.lane.b32.xlu0 %v1450, 8
      %v1573 = vpop.permute.xlu0 %1572
      %1574 = vrot.lane.b32.xlu0 %v1458, 8
      %v1575 = vpop.permute.xlu0 %1574
      %1576 = vrot.lane.b32.xlu0 %v1466, 8
      %v1577 = vpop.permute.xlu0 %1576
      %1578 = vrot.lane.b32.xlu0 %v1474, 8
      %v1579 = vpop.permute.xlu0 %1578
      %1580 = vrot.lane.b32.xlu0 %v1482, 8
      %v1581 = vpop.permute.xlu0 %1580
      %1582 = vrot.lane.b32.xlu0 %v1490, 8
      %v1583 = vpop.permute.xlu0 %1582
      %1584 = vrot.lane.b32.xlu0 %v1498, 8
      %v1585 = vpop.permute.xlu0 %1584
      %1586 = vrot.lane.b32.xlu0 %v1506, 8
      %v1587 = vpop.permute.xlu0 %1586
      %1588 = vrot.lane.b32.xlu0 %v1514, 8
      %v1589 = vpop.permute.xlu0 %1588
      %1590 = vrot.lane.b32.xlu0 %v1522, 8
      %v1591 = vpop.permute.xlu0 %1590
      %1592 = vrot.lane.b32.xlu0 %v1530, 8
      %v1593 = vpop.permute.xlu0 %1592
      %1594 = vrot.lane.b32.xlu0 %v1538, 8
      %v1595 = vpop.permute.xlu0 %1594
      %1596 = vrot.lane.b32.xlu0 %v1546, 8
      %v1597 = vpop.permute.xlu0 %1596
      %1598 = vrot.lane.b32.xlu0 %v1554, 8
      %v1599 = vpop.permute.xlu0 %1598
      %1600 = vrot.lane.b32.xlu0 %v1562, 8
      %v1601 = vpop.permute.xlu0 %1600
      %1602 = vrot.lane.b32.xlu0 %v1565, 8
      %v1603 = vpop.permute.xlu0 %1602
      %v1605 = vunpack.c.l.b16 %v1318
      %v1606 = vpack.c.b16 %v1357, %v1605
      %v1607 = vrot.slane %v1606, 1
      %v1608 = vrot.slane %v1394, 1
      %v1609 = vsel %vm514, %v1607, %v1608
      %v1610 = vrot.slane %v1395, 1
      %v1611 = vsel %vm514, %v1608, %v1610
      %v1612 = vrot.slane %v1396, 1
      %v1613 = vsel %vm514, %v1610, %v1612
      %v1614 = vrot.slane %v1397, 1
      %v1615 = vsel %vm514, %v1612, %v1614
      %v1616 = vrot.slane %v1398, 1
      %v1617 = vsel %vm514, %v1614, %v1616
      %v1618 = vrot.slane %v1399, 1
      %v1619 = vsel %vm514, %v1616, %v1618
      %v1620 = vrot.slane %v1400, 1
      %v1621 = vsel %vm514, %v1618, %v1620
      %v1622 = vrot.slane %v1401, 1
      %v1623 = vsel %vm514, %v1620, %v1622
      %v1624 = vrot.slane %v1402, 1
      %v1625 = vsel %vm514, %v1622, %v1624
      %v1626 = vrot.slane %v1403, 1
      %v1627 = vsel %vm514, %v1624, %v1626
      %v1628 = vrot.slane %v1404, 1
      %v1629 = vsel %vm514, %v1626, %v1628
      %v1630 = vrot.slane %v1405, 1
      %v1631 = vsel %vm514, %v1628, %v1630
      %v1632 = vrot.slane %v1406, 1
      %v1633 = vsel %vm514, %v1630, %v1632
      %v1634 = vrot.slane %v1407, 1
      %v1635 = vsel %vm514, %v1632, %v1634
      %v1636 = vrot.slane %v1408, 1
      %v1637 = vsel %vm514, %v1634, %v1636
      %v1638 = vrot.slane %v1409, 1
      %v1639 = vsel %vm514, %v1636, %v1638
      %v1640 = vrot.slane %v1410, 1
      %v1641 = vsel %vm514, %v1638, %v1640
      %v1642 = vrot.slane %v1414, 1
      %v1643 = vsel %vm514, %v1640, %v1642
      %1644 = vrot.lane.b32.xlu0 %v1609, 16
      %v1645 = vpop.permute.xlu0 %1644
      %1646 = vrot.lane.b32.xlu0 %v1611, 16
      %v1647 = vpop.permute.xlu0 %1646
      %1648 = vrot.lane.b32.xlu0 %v1613, 16
      %v1649 = vpop.permute.xlu0 %1648
      %1650 = vrot.lane.b32.xlu0 %v1615, 16
      %v1651 = vpop.permute.xlu0 %1650
      %1652 = vrot.lane.b32.xlu0 %v1617, 16
      %v1653 = vpop.permute.xlu0 %1652
      %1654 = vrot.lane.b32.xlu0 %v1619, 16
      %v1655 = vpop.permute.xlu0 %1654
      %1656 = vrot.lane.b32.xlu0 %v1621, 16
      %v1657 = vpop.permute.xlu0 %1656
      %1658 = vrot.lane.b32.xlu0 %v1623, 16
      %v1659 = vpop.permute.xlu0 %1658
      %1660 = vrot.lane.b32.xlu0 %v1625, 16
      %v1661 = vpop.permute.xlu0 %1660
      %1662 = vrot.lane.b32.xlu0 %v1627, 16
      %v1663 = vpop.permute.xlu0 %1662
      %1664 = vrot.lane.b32.xlu0 %v1629, 16
      %v1665 = vpop.permute.xlu0 %1664
      %1666 = vrot.lane.b32.xlu0 %v1631, 16
      %v1667 = vpop.permute.xlu0 %1666
      %1668 = vrot.lane.b32.xlu0 %v1633, 16
      %v1669 = vpop.permute.xlu0 %1668
      %1670 = vrot.lane.b32.xlu0 %v1635, 16
      %v1671 = vpop.permute.xlu0 %1670
      %1672 = vrot.lane.b32.xlu0 %v1637, 16
      %v1673 = vpop.permute.xlu0 %1672
      %1674 = vrot.lane.b32.xlu0 %v1639, 16
      %v1675 = vpop.permute.xlu0 %1674
      %1676 = vrot.lane.b32.xlu0 %v1641, 16
      %v1677 = vpop.permute.xlu0 %1676
      %1678 = vrot.lane.b32.xlu0 %v1643, 16
      %v1679 = vpop.permute.xlu0 %1678
      %1680 = vrot.lane.b32.xlu0 %v1642, 16
      %v1681 = vpop.permute.xlu0 %1680
      %v1683 = vsel %vm588, %v1393, %v1567
      %v1685 = vsel %vm588, %v1394, %v1569
      %v1687 = vsel %vm588, %v1395, %v1571
      %v1689 = vsel %vm588, %v1396, %v1573
      %v1691 = vsel %vm588, %v1397, %v1575
      %v1693 = vsel %vm588, %v1398, %v1577
      %v1695 = vsel %vm588, %v1399, %v1579
      %v1697 = vsel %vm588, %v1400, %v1581
      %v1699 = vsel %vm588, %v1401, %v1583
      %v1701 = vsel %vm588, %v1402, %v1585
      %v1703 = vsel %vm588, %v1403, %v1587
      %v1705 = vsel %vm588, %v1404, %v1589
      %v1707 = vsel %vm588, %v1405, %v1591
      %v1709 = vsel %vm588, %v1406, %v1593
      %v1711 = vsel %vm588, %v1407, %v1595
      %v1713 = vsel %vm588, %v1408, %v1597
      %v1715 = vsel %vm588, %v1409, %v1599
      %v1717 = vsel %vm588, %v1410, %v1601
      %v1720 = vsel %vm588, %v1411, %v1603
      %v1722 = vsel %vm625, %v1683, %v1645
      %v1724 = vsel %vm625, %v1685, %v1647
      %v1726 = vsel %vm625, %v1687, %v1649
      %v1728 = vsel %vm625, %v1689, %v1651
      %v1730 = vsel %vm625, %v1691, %v1653
      %v1732 = vsel %vm625, %v1693, %v1655
      %v1734 = vsel %vm625, %v1695, %v1657
      %v1736 = vsel %vm625, %v1697, %v1659
      %v1738 = vsel %vm625, %v1699, %v1661
      %v1740 = vsel %vm625, %v1701, %v1663
      %v1742 = vsel %vm625, %v1703, %v1665
      %v1744 = vsel %vm625, %v1705, %v1667
      %v1746 = vsel %vm625, %v1707, %v1669
      %v1748 = vsel %vm625, %v1709, %v1671
      %v1750 = vsel %vm625, %v1711, %v1673
      %v1752 = vsel %vm625, %v1713, %v1675
      %v1754 = vsel %vm625, %v1715, %v1677
      %v1756 = vsel %vm625, %v1717, %v1679
      %v1758 = vsel %vm625, %v1720, %v1681
      %v1759 = vld [vmem:[%s1 + $0x18] sm:$0xf]
      %v1760 = vld [vmem:[%s1 + $0x1c] sm:$0xf]
      %v1761 = vld [vmem:[%s1 + $0x20] sm:$0xf]
      %vm1781 = vcmask 1045504
      %v1782 = vrot.slane %v1722, 2
      %v1783 = vrot.slane %v1724, 2
      %v1784 = vsel %vm1781, %v1782, %v1783
      %v1785 = vrot.slane %v1726, 2
      %v1786 = vsel %vm1781, %v1783, %v1785
      %v1787 = vrot.slane %v1728, 2
      %v1788 = vsel %vm1781, %v1785, %v1787
      %v1789 = vrot.slane %v1730, 2
      %v1790 = vsel %vm1781, %v1787, %v1789
      %v1791 = vrot.slane %v1732, 2
      %v1792 = vsel %vm1781, %v1789, %v1791
      %v1793 = vrot.slane %v1734, 2
      %v1794 = vsel %vm1781, %v1791, %v1793
      %v1795 = vrot.slane %v1736, 2
      %v1796 = vsel %vm1781, %v1793, %v1795
      %v1797 = vrot.slane %v1738, 2
      %v1798 = vsel %vm1781, %v1795, %v1797
      %v1799 = vrot.slane %v1740, 2
      %v1800 = vsel %vm1781, %v1797, %v1799
      %v1801 = vrot.slane %v1742, 2
      %v1802 = vsel %vm1781, %v1799, %v1801
      %v1803 = vrot.slane %v1744, 2
      %v1804 = vsel %vm1781, %v1801, %v1803
      %v1805 = vrot.slane %v1746, 2
      %v1806 = vsel %vm1781, %v1803, %v1805
      %v1807 = vrot.slane %v1748, 2
      %v1808 = vsel %vm1781, %v1805, %v1807
      %v1809 = vrot.slane %v1750, 2
      %v1810 = vsel %vm1781, %v1807, %v1809
      %v1811 = vrot.slane %v1752, 2
      %v1812 = vsel %vm1781, %v1809, %v1811
      %v1813 = vrot.slane %v1754, 2
      %v1814 = vsel %vm1781, %v1811, %v1813
      %v1815 = vrot.slane %v1756, 2
      %v1816 = vsel %vm1781, %v1813, %v1815
      %v1817 = vrot.slane %v1758, 2
      %v1818 = vsel %vm1781, %v1815, %v1817
      %v1822 = vunpack.c.l.b16 %v1759
      %v1823 = vunpack.c.l.b16 %v1760
      %v1824 = vunpack.c.l.b16 %v1761
      %v1825 = vpack.c.b16 %v1823, %v1822
      %v1826 = vpack.c.b16 %v1824, %v1824
      %v1829 = vsel %vm819, %v1784, 0
      %v1832 = vsel %vm819, %v1786, 0
      %v1835 = vsel %vm819, %v1788, 0
      %v1838 = vsel %vm819, %v1790, 0
      %v1841 = vsel %vm819, %v1792, 0
      %v1844 = vsel %vm819, %v1794, 0
      %v1847 = vsel %vm819, %v1796, 0
      %v1850 = vsel %vm819, %v1798, 0
      %v1853 = vsel %vm819, %v1800, 0
      %v1856 = vsel %vm819, %v1802, 0
      %v1859 = vsel %vm819, %v1804, 0
      %v1862 = vsel %vm819, %v1806, 0
      %v1865 = vsel %vm819, %v1808, 0
      %v1868 = vsel %vm819, %v1810, 0
      %v1871 = vsel %vm819, %v1812, 0
      %v1874 = vsel %vm819, %v1814, 0
      %v1877 = vsel %vm819, %v1816, 0
      %v1880 = vsel %vm819, %v1818, 0
      %v1883 = vsel %vm874, %v1826, 0
      %1885 = vmatprep.subr.bf16.mxu0 0
      %1886 = vmatpush1.bf16.msra.mxu0 0
      %1887 = vmatprep.subr.bf16.mxu0 0
      %1888 = vmatpush1.bf16.msra.mxu0 0
      %1889 = vmatprep.subr.bf16.mxu0 0
      %1890 = vmatpush1.bf16.msra.mxu0 0
      %1891 = vmatprep.subr.bf16.mxu0 0
      %1892 = vmatpush1.bf16.msra.mxu0 0
      %1893 = vmatprep.subr.bf16.mxu0 0
      %1894 = vmatpush1.bf16.msra.mxu0 0
      %1895 = vmatprep.subr.bf16.mxu0 0
      %1896 = vmatpush1.bf16.msra.mxu0 0
      %1897 = vmatprep.subr.bf16.mxu0 0
      %1898 = vmatpush1.bf16.msra.mxu0 %v1883
      %1899 = vmatprep.subr.bf16.mxu0 0
      %1900 = vmatpush1.bf16.msra.mxu0 %v1825
      %1901 = vmatprep.subr.bf16.mxu0 0
      %1902 = vmatpush2.bf16.msra.mxu0 0
      %1903 = vmatprep.subr.bf16.mxu0 0
      %1904 = vmatpush2.bf16.msra.mxu0 0
      %1905 = vmatprep.subr.bf16.mxu0 0
      %1906 = vmatpush2.bf16.msra.mxu0 0
      %1907 = vmatprep.subr.bf16.mxu0 0
      %1908 = vmatpush2.bf16.msra.mxu0 0
      %1909 = vmatprep.subr.bf16.mxu0 0
      %1910 = vmatpush2.bf16.msra.mxu0 0
      %1911 = vmatprep.subr.bf16.mxu0 0
      %1912 = vmatpush2.bf16.msra.mxu0 0
      %1913 = vmatprep.subr.bf16.mxu0 0
      %1914 = vmatpush2.bf16.msra.mxu0 0
      %1915 = vmatprep.subr.bf16.mxu0 0
      %1916 = vmatpush2.bf16.msra.mxu0 0
      %1917 = vmatprep.mubr.bf16.mxu0 0
      %1918 = vmatmul.mubr.bf16.gmra.mxu0 %v1829
      %v1919 = vpop.f32.mrf.mxu0
      %v1920 = vadd.f32 0.0, %v1919
      %v1921 = vpop.f32.mrf.mxu0
      %v1922 = vpop.f32.mrf.mxu0
      %v1923 = vadd.f32 0.0, %v1922
      %v1924 = vpop.f32.mrf.mxu0
      %1925 = vmatprep.mubr.bf16.mxu0 0
      %1926 = vmatmul.mubr.bf16.gmra.mxu0 %v1832
      %v1927 = vpop.f32.mrf.mxu0
      %v1928 = vadd.f32 0.0, %v1927
      %v1929 = vpop.f32.mrf.mxu0
      %v1930 = vpop.f32.mrf.mxu0
      %v1931 = vadd.f32 0.0, %v1930
      %v1932 = vpop.f32.mrf.mxu0
      %1933 = vmatprep.mubr.bf16.mxu0 0
      %1934 = vmatmul.mubr.bf16.gmra.mxu0 %v1835
      %v1935 = vpop.f32.mrf.mxu0
      %v1936 = vadd.f32 0.0, %v1935
      %v1937 = vpop.f32.mrf.mxu0
      %v1938 = vpop.f32.mrf.mxu0
      %v1939 = vadd.f32 0.0, %v1938
      %v1940 = vpop.f32.mrf.mxu0
      %1941 = vmatprep.mubr.bf16.mxu0 0
      %1942 = vmatmul.mubr.bf16.gmra.mxu0 %v1838
      %v1943 = vpop.f32.mrf.mxu0
      %v1944 = vadd.f32 0.0, %v1943
      %v1945 = vpop.f32.mrf.mxu0
      %v1946 = vpop.f32.mrf.mxu0
      %v1947 = vadd.f32 0.0, %v1946
      %v1948 = vpop.f32.mrf.mxu0
      %1949 = vmatprep.mubr.bf16.mxu0 0
      %1950 = vmatmul.mubr.bf16.gmra.mxu0 %v1841
      %v1951 = vpop.f32.mrf.mxu0
      %v1952 = vadd.f32 0.0, %v1951
      %v1953 = vpop.f32.mrf.mxu0
      %v1954 = vpop.f32.mrf.mxu0
      %v1955 = vadd.f32 0.0, %v1954
      %v1956 = vpop.f32.mrf.mxu0
      %1957 = vmatprep.mubr.bf16.mxu0 0
      %1958 = vmatmul.mubr.bf16.gmra.mxu0 %v1844
      %v1959 = vpop.f32.mrf.mxu0
      %v1960 = vadd.f32 0.0, %v1959
      %v1961 = vpop.f32.mrf.mxu0
      %v1962 = vpop.f32.mrf.mxu0
      %v1963 = vadd.f32 0.0, %v1962
      %v1964 = vpop.f32.mrf.mxu0
      %1965 = vmatprep.mubr.bf16.mxu0 0
      %1966 = vmatmul.mubr.bf16.gmra.mxu0 %v1847
      %v1967 = vpop.f32.mrf.mxu0
      %v1968 = vadd.f32 0.0, %v1967
      %v1969 = vpop.f32.mrf.mxu0
      %v1970 = vpop.f32.mrf.mxu0
      %v1971 = vadd.f32 0.0, %v1970
      %v1972 = vpop.f32.mrf.mxu0
      %1973 = vmatprep.mubr.bf16.mxu0 0
      %1974 = vmatmul.mubr.bf16.gmra.mxu0 %v1850
      %v1975 = vpop.f32.mrf.mxu0
      %v1976 = vadd.f32 0.0, %v1975
      %v1977 = vpop.f32.mrf.mxu0
      %v1978 = vpop.f32.mrf.mxu0
      %v1979 = vadd.f32 0.0, %v1978
      %v1980 = vpop.f32.mrf.mxu0
      %1981 = vmatprep.mubr.bf16.mxu0 0
      %1982 = vmatmul.mubr.bf16.gmra.mxu0 %v1853
      %v1983 = vpop.f32.mrf.mxu0
      %v1984 = vadd.f32 0.0, %v1983
      %v1985 = vpop.f32.mrf.mxu0
      %v1986 = vpop.f32.mrf.mxu0
      %v1987 = vadd.f32 0.0, %v1986
      %v1988 = vpop.f32.mrf.mxu0
      %1989 = vmatprep.mubr.bf16.mxu0 0
      %1990 = vmatmul.mubr.bf16.gmra.mxu0 %v1856
      %v1991 = vpop.f32.mrf.mxu0
      %v1992 = vadd.f32 0.0, %v1991
      %v1993 = vpop.f32.mrf.mxu0
      %v1994 = vpop.f32.mrf.mxu0
      %v1995 = vadd.f32 0.0, %v1994
      %v1996 = vpop.f32.mrf.mxu0
      %1997 = vmatprep.mubr.bf16.mxu0 0
      %1998 = vmatmul.mubr.bf16.gmra.mxu0 %v1859
      %v1999 = vpop.f32.mrf.mxu0
      %v2000 = vadd.f32 0.0, %v1999
      %v2001 = vpop.f32.mrf.mxu0
      %v2002 = vpop.f32.mrf.mxu0
      %v2003 = vadd.f32 0.0, %v2002
      %v2004 = vpop.f32.mrf.mxu0
      %2005 = vmatprep.mubr.bf16.mxu0 0
      %2006 = vmatmul.mubr.bf16.gmra.mxu0 %v1862
      %v2007 = vpop.f32.mrf.mxu0
      %v2008 = vadd.f32 0.0, %v2007
      %v2009 = vpop.f32.mrf.mxu0
      %v2010 = vpop.f32.mrf.mxu0
      %v2011 = vadd.f32 0.0, %v2010
      %v2012 = vpop.f32.mrf.mxu0
      %2013 = vmatprep.mubr.bf16.mxu0 0
      %2014 = vmatmul.mubr.bf16.gmra.mxu0 %v1865
      %v2015 = vpop.f32.mrf.mxu0
      %v2016 = vadd.f32 0.0, %v2015
      %v2017 = vpop.f32.mrf.mxu0
      %v2018 = vpop.f32.mrf.mxu0
      %v2019 = vadd.f32 0.0, %v2018
      %v2020 = vpop.f32.mrf.mxu0
      %2021 = vmatprep.mubr.bf16.mxu0 0
      %2022 = vmatmul.mubr.bf16.gmra.mxu0 %v1868
      %v2023 = vpop.f32.mrf.mxu0
      %v2024 = vadd.f32 0.0, %v2023
      %v2025 = vpop.f32.mrf.mxu0
      %v2026 = vpop.f32.mrf.mxu0
      %v2027 = vadd.f32 0.0, %v2026
      %v2028 = vpop.f32.mrf.mxu0
      %2029 = vmatprep.mubr.bf16.mxu0 0
      %2030 = vmatmul.mubr.bf16.gmra.mxu0 %v1871
      %v2031 = vpop.f32.mrf.mxu0
      %v2032 = vadd.f32 0.0, %v2031
      %v2033 = vpop.f32.mrf.mxu0
      %v2034 = vpop.f32.mrf.mxu0
      %v2035 = vadd.f32 0.0, %v2034
      %v2036 = vpop.f32.mrf.mxu0
      %2037 = vmatprep.mubr.bf16.mxu0 0
      %2038 = vmatmul.mubr.bf16.gmra.mxu0 %v1874
      %v2039 = vpop.f32.mrf.mxu0
      %v2040 = vadd.f32 0.0, %v2039
      %v2041 = vpop.f32.mrf.mxu0
      %v2042 = vpop.f32.mrf.mxu0
      %v2043 = vadd.f32 0.0, %v2042
      %v2044 = vpop.f32.mrf.mxu0
      %2045 = vmatprep.mubr.bf16.mxu0 0
      %2046 = vmatmul.mubr.bf16.gmra.mxu0 %v1877
      %v2047 = vpop.f32.mrf.mxu0
      %v2048 = vadd.f32 0.0, %v2047
      %v2049 = vpop.f32.mrf.mxu0
      %v2050 = vpop.f32.mrf.mxu0
      %v2051 = vadd.f32 0.0, %v2050
      %v2052 = vpop.f32.mrf.mxu0
      %2053 = vmatprep.mubr.bf16.mxu0 0
      %2054 = vmatmul.mubr.bf16.gmra.mxu0 %v1880
      %v2055 = vpop.f32.mrf.mxu0
      %v2056 = vadd.f32 0.0, %v2055
      %v2057 = vpop.f32.mrf.mxu0
      %v2058 = vpop.f32.mrf.mxu0
      %v2059 = vadd.f32 0.0, %v2058
      %v2060 = vpop.f32.mrf.mxu0
      %2061 = vdwg.mxu0
      %v2062 = vadd.f32 %v1138, %v1920
      %v2063 = vadd.f32 %v1141, %v1923
      %v2064 = vadd.f32 %v1146, %v1928
      %v2065 = vadd.f32 %v1149, %v1931
      %v2066 = vadd.f32 %v1154, %v1936
      %v2067 = vadd.f32 %v1157, %v1939
      %v2068 = vadd.f32 %v1162, %v1944
      %v2069 = vadd.f32 %v1165, %v1947
      %v2070 = vadd.f32 %v1170, %v1952
      %v2071 = vadd.f32 %v1173, %v1955
      %v2072 = vadd.f32 %v1178, %v1960
      %v2073 = vadd.f32 %v1181, %v1963
      %v2074 = vadd.f32 %v1186, %v1968
      %v2075 = vadd.f32 %v1189, %v1971
      %v2076 = vadd.f32 %v1194, %v1976
      %v2077 = vadd.f32 %v1197, %v1979
      %v2078 = vadd.f32 %v1202, %v1984
      %v2079 = vadd.f32 %v1205, %v1987
      %v2080 = vadd.f32 %v1210, %v1992
      %v2081 = vadd.f32 %v1213, %v1995
      %v2082 = vadd.f32 %v1218, %v2000
      %v2083 = vadd.f32 %v1221, %v2003
      %v2084 = vadd.f32 %v1226, %v2008
      %v2085 = vadd.f32 %v1229, %v2011
      %v2086 = vadd.f32 %v1234, %v2016
      %v2087 = vadd.f32 %v1237, %v2019
      %v2088 = vadd.f32 %v1242, %v2024
      %v2089 = vadd.f32 %v1245, %v2027
      %v2090 = vadd.f32 %v1250, %v2032
      %v2091 = vadd.f32 %v1253, %v2035
      %v2092 = vadd.f32 %v1258, %v2040
      %v2093 = vadd.f32 %v1261, %v2043
      %v2094 = vadd.f32 %v1266, %v2048
      %v2095 = vadd.f32 %v1269, %v2051
      %v2096 = vadd.f32 %v1274, %v2056
      %v2097 = vadd.f32 %v1277, %v2059
      %v2098 = vld [vmem:[%s2] sm:$0x1]
      %v2100 = vlaneseq
      %v2101 = vshrl.u32 %v2100, 7
      %v2102 = vsub.s32 0, %v2101
      %v2103 = vrot.slane %v2098, %v2102
      %v2105 = vadd.f32 %v2062, %v2103
      %v2106 = vadd.f32 %v2063, %v2103
      %v2107 = vadd.f32 %v2064, %v2103
      %v2108 = vadd.f32 %v2065, %v2103
      %v2109 = vadd.f32 %v2066, %v2103
      %v2110 = vadd.f32 %v2067, %v2103
      %v2111 = vadd.f32 %v2068, %v2103
      %v2112 = vadd.f32 %v2069, %v2103
      %v2113 = vadd.f32 %v2070, %v2103
      %v2114 = vadd.f32 %v2071, %v2103
      %v2115 = vadd.f32 %v2072, %v2103
      %v2116 = vadd.f32 %v2073, %v2103
      %v2117 = vadd.f32 %v2074, %v2103
      %v2118 = vadd.f32 %v2075, %v2103
      %v2119 = vadd.f32 %v2076, %v2103
      %v2120 = vadd.f32 %v2077, %v2103
      %v2121 = vadd.f32 %v2078, %v2103
      %v2122 = vadd.f32 %v2079, %v2103
      %v2123 = vadd.f32 %v2080, %v2103
      %v2124 = vadd.f32 %v2081, %v2103
      %v2125 = vadd.f32 %v2082, %v2103
      %v2126 = vadd.f32 %v2083, %v2103
      %v2127 = vadd.f32 %v2084, %v2103
      %v2128 = vadd.f32 %v2085, %v2103
      %v2129 = vadd.f32 %v2086, %v2103
      %v2130 = vadd.f32 %v2087, %v2103
      %v2131 = vadd.f32 %v2088, %v2103
      %v2132 = vadd.f32 %v2089, %v2103
      %v2133 = vadd.f32 %v2090, %v2103
      %v2134 = vadd.f32 %v2091, %v2103
      %v2135 = vadd.f32 %v2092, %v2103
      %v2136 = vadd.f32 %v2093, %v2103
      %v2137 = vadd.f32 %v2094, %v2103
      %v2138 = vadd.f32 %v2095, %v2103
      %v2139 = vadd.f32 %v2096, %v2103
      %v2140 = vadd.f32 %v2097, %v2103
      %v2141 = vmax.f32 %v2105, 0.0
      %v2142 = vmax.f32 %v2106, 0.0
      %v2143 = vmax.f32 %v2107, 0.0
      %v2144 = vmax.f32 %v2108, 0.0
      %v2145 = vmax.f32 %v2109, 0.0
      %v2146 = vmax.f32 %v2110, 0.0
      %v2147 = vmax.f32 %v2111, 0.0
      %v2148 = vmax.f32 %v2112, 0.0
      %v2149 = vmax.f32 %v2113, 0.0
      %v2150 = vmax.f32 %v2114, 0.0
      %v2151 = vmax.f32 %v2115, 0.0
      %v2152 = vmax.f32 %v2116, 0.0
      %v2153 = vmax.f32 %v2117, 0.0
      %v2154 = vmax.f32 %v2118, 0.0
      %v2155 = vmax.f32 %v2119, 0.0
      %v2156 = vmax.f32 %v2120, 0.0
      %v2157 = vmax.f32 %v2121, 0.0
      %v2158 = vmax.f32 %v2122, 0.0
      %v2159 = vmax.f32 %v2123, 0.0
      %v2160 = vmax.f32 %v2124, 0.0
      %v2161 = vmax.f32 %v2125, 0.0
      %v2162 = vmax.f32 %v2126, 0.0
      %v2163 = vmax.f32 %v2127, 0.0
      %v2164 = vmax.f32 %v2128, 0.0
      %v2165 = vmax.f32 %v2129, 0.0
      %v2166 = vmax.f32 %v2130, 0.0
      %v2167 = vmax.f32 %v2131, 0.0
      %v2168 = vmax.f32 %v2132, 0.0
      %v2169 = vmax.f32 %v2133, 0.0
      %v2170 = vmax.f32 %v2134, 0.0
      %v2171 = vmax.f32 %v2135, 0.0
      %v2172 = vmax.f32 %v2136, 0.0
      %v2173 = vmax.f32 %v2137, 0.0
      %v2174 = vmax.f32 %v2138, 0.0
      %v2175 = vmax.f32 %v2139, 0.0
      %v2176 = vmax.f32 %v2140, 0.0
      %v2177 = vpack.c.bf16 %v2142, %v2141
      %v2178 = vpack.c.bf16 %v2144, %v2143
      %v2179 = vpack.c.bf16 %v2146, %v2145
      %v2180 = vpack.c.bf16 %v2148, %v2147
      %v2181 = vpack.c.bf16 %v2150, %v2149
      %v2182 = vpack.c.bf16 %v2152, %v2151
      %v2183 = vpack.c.bf16 %v2154, %v2153
      %v2184 = vpack.c.bf16 %v2156, %v2155
      %v2185 = vpack.c.bf16 %v2158, %v2157
      %v2186 = vpack.c.bf16 %v2160, %v2159
      %v2187 = vpack.c.bf16 %v2162, %v2161
      %v2188 = vpack.c.bf16 %v2164, %v2163
      %v2189 = vpack.c.bf16 %v2166, %v2165
      %v2190 = vpack.c.bf16 %v2168, %v2167
      %v2191 = vpack.c.bf16 %v2170, %v2169
      %v2192 = vpack.c.bf16 %v2172, %v2171
      %v2193 = vpack.c.bf16 %v2174, %v2173
      %v2194 = vpack.c.bf16 %v2176, %v2175
      %v2213 = vunpack.c.l.b16 %v2177
      %v2214 = vunpack.c.h.b16 %v2177
      %v2215 = vunpack.c.l.b16 %v2178
      %v2216 = vunpack.c.h.b16 %v2178
      %v2217 = vunpack.c.l.b16 %v2179
      %v2218 = vunpack.c.h.b16 %v2179
      %v2219 = vunpack.c.l.b16 %v2180
      %v2220 = vunpack.c.h.b16 %v2180
      %v2221 = vunpack.c.l.b16 %v2181
      %v2222 = vunpack.c.h.b16 %v2181
      %v2223 = vunpack.c.l.b16 %v2182
      %v2224 = vunpack.c.h.b16 %v2182
      %v2225 = vunpack.c.l.b16 %v2183
      %v2226 = vunpack.c.h.b16 %v2183
      %v2227 = vunpack.c.l.b16 %v2184
      %v2228 = vunpack.c.h.b16 %v2184
      %v2229 = vunpack.c.l.b16 %v2185
      %v2230 = vunpack.c.h.b16 %v2185
      %v2231 = vunpack.c.l.b16 %v2186
      %v2232 = vunpack.c.h.b16 %v2186
      %v2233 = vunpack.c.l.b16 %v2187
      %v2234 = vunpack.c.h.b16 %v2187
      %v2235 = vunpack.c.l.b16 %v2188
      %v2236 = vunpack.c.h.b16 %v2188
      %v2237 = vunpack.c.l.b16 %v2189
      %v2238 = vunpack.c.h.b16 %v2189
      %v2239 = vunpack.c.l.b16 %v2190
      %v2240 = vunpack.c.h.b16 %v2190
      %v2241 = vunpack.c.l.b16 %v2191
      %v2242 = vunpack.c.h.b16 %v2191
      %v2243 = vunpack.c.l.b16 %v2192
      %v2244 = vunpack.c.h.b16 %v2192
      %v2245 = vunpack.c.l.b16 %v2193
      %v2246 = vunpack.c.h.b16 %v2193
      %v2247 = vunpack.c.l.b16 %v2194
      %v2248 = vunpack.c.h.b16 %v2194
      %v2249 = vpack.c.b16 %v2213, %v2213
      %v2250 = vpack.c.b16 %v2214, %v2214
      %v2251 = vpack.c.b16 %v2215, %v2215
      %v2252 = vpack.c.b16 %v2216, %v2216
      %v2253 = vpack.c.b16 %v2217, %v2217
      %v2254 = vpack.c.b16 %v2218, %v2218
      %v2255 = vpack.c.b16 %v2219, %v2219
      %v2256 = vpack.c.b16 %v2220, %v2220
      %v2257 = vpack.c.b16 %v2221, %v2221
      %v2258 = vpack.c.b16 %v2222, %v2222
      %v2259 = vpack.c.b16 %v2223, %v2223
      %v2260 = vpack.c.b16 %v2224, %v2224
      %v2261 = vpack.c.b16 %v2225, %v2225
      %v2262 = vpack.c.b16 %v2226, %v2226
      %v2263 = vpack.c.b16 %v2227, %v2227
      %v2264 = vpack.c.b16 %v2228, %v2228
      %v2265 = vpack.c.b16 %v2229, %v2229
      %v2266 = vpack.c.b16 %v2230, %v2230
      %v2267 = vpack.c.b16 %v2231, %v2231
      %v2268 = vpack.c.b16 %v2232, %v2232
      %v2269 = vpack.c.b16 %v2233, %v2233
      %v2270 = vpack.c.b16 %v2234, %v2234
      %v2271 = vpack.c.b16 %v2235, %v2235
      %v2272 = vpack.c.b16 %v2236, %v2236
      %v2273 = vpack.c.b16 %v2237, %v2237
      %v2274 = vpack.c.b16 %v2238, %v2238
      %v2275 = vpack.c.b16 %v2239, %v2239
      %v2276 = vpack.c.b16 %v2240, %v2240
      %v2277 = vpack.c.b16 %v2241, %v2241
      %v2278 = vpack.c.b16 %v2242, %v2242
      %v2279 = vpack.c.b16 %v2243, %v2243
      %v2280 = vpack.c.b16 %v2244, %v2244
      %v2281 = vpack.c.b16 %v2245, %v2245
      %v2282 = vpack.c.b16 %v2246, %v2246
      %v2283 = vpack.c.b16 %v2247, %v2247
      %v2284 = vpack.c.b16 %v2248, %v2248
      %vm2321 = vcmask 125952
      %2322 = vst.msk [vmem:[%s192] sm:$0xf] %vm2321, %v2249
      %2323 = vst.msk [vmem:[%s192 + $0x4] sm:$0xf] %vm2321, %v2250
      %2324 = vst.msk [vmem:[%s192 + $0x8] sm:$0xf] %vm2321, %v2251
      %2325 = vst.msk [vmem:[%s192 + $0xc] sm:$0xf] %vm2321, %v2252
      %2326 = vst.msk [vmem:[%s192 + $0x10] sm:$0xf] %vm2321, %v2253
      %2327 = vst.msk [vmem:[%s192 + $0x14] sm:$0xf] %vm2321, %v2254
      %2328 = vst.msk [vmem:[%s192 + $0x18] sm:$0xf] %vm2321, %v2255
      %2329 = vst.msk [vmem:[%s192 + $0x1c] sm:$0xf] %vm2321, %v2256
      %2330 = vst.msk [vmem:[%s192 + $0x20] sm:$0xf] %vm2321, %v2257
      %2331 = vst.msk [vmem:[%s192 + $0x24] sm:$0xf] %vm2321, %v2258
      %2332 = vst.msk [vmem:[%s192 + $0x28] sm:$0xf] %vm2321, %v2259
      %2333 = vst.msk [vmem:[%s192 + $0x2c] sm:$0xf] %vm2321, %v2260
      %2334 = vst.msk [vmem:[%s192 + $0x30] sm:$0xf] %vm2321, %v2261
      %2335 = vst.msk [vmem:[%s192 + $0x34] sm:$0xf] %vm2321, %v2262
      %2336 = vst.msk [vmem:[%s192 + $0x38] sm:$0xf] %vm2321, %v2263
      %2337 = vst.msk [vmem:[%s192 + $0x3c] sm:$0xf] %vm2321, %v2264
      %2338 = vst.msk [vmem:[%s192 + $0x40] sm:$0xf] %vm2321, %v2265
      %2339 = vst.msk [vmem:[%s192 + $0x44] sm:$0xf] %vm2321, %v2266
      %2340 = vst.msk [vmem:[%s192 + $0x48] sm:$0xf] %vm2321, %v2267
      %2341 = vst.msk [vmem:[%s192 + $0x4c] sm:$0xf] %vm2321, %v2268
      %2342 = vst.msk [vmem:[%s192 + $0x50] sm:$0xf] %vm2321, %v2269
      %2343 = vst.msk [vmem:[%s192 + $0x54] sm:$0xf] %vm2321, %v2270
      %2344 = vst.msk [vmem:[%s192 + $0x58] sm:$0xf] %vm2321, %v2271
      %2345 = vst.msk [vmem:[%s192 + $0x5c] sm:$0xf] %vm2321, %v2272
      %2346 = vst.msk [vmem:[%s192 + $0x60] sm:$0xf] %vm2321, %v2273
      %2347 = vst.msk [vmem:[%s192 + $0x64] sm:$0xf] %vm2321, %v2274
      %2348 = vst.msk [vmem:[%s192 + $0x68] sm:$0xf] %vm2321, %v2275
      %2349 = vst.msk [vmem:[%s192 + $0x6c] sm:$0xf] %vm2321, %v2276
      %2350 = vst.msk [vmem:[%s192 + $0x70] sm:$0xf] %vm2321, %v2277
      %2351 = vst.msk [vmem:[%s192 + $0x74] sm:$0xf] %vm2321, %v2278
      %2352 = vst.msk [vmem:[%s192 + $0x78] sm:$0xf] %vm2321, %v2279
      %2353 = vst.msk [vmem:[%s192 + $0x7c] sm:$0xf] %vm2321, %v2280
      %2354 = vst.msk [vmem:[%s192 + $0x80] sm:$0xf] %vm2321, %v2281
      %2355 = vst.msk [vmem:[%s192 + $0x84] sm:$0xf] %vm2321, %v2282
      %2356 = vst.msk [vmem:[%s192 + $0x88] sm:$0xf] %vm2321, %v2283
      %2357 = vst.msk [vmem:[%s192 + $0x8c] sm:$0xf] %vm2321, %v2284
      %s2358 = smul.u32 36, %s19
      %p2359 = scmp.lt.s32.totalorder %s18, 1
      %s2360 = scalar_select %p2359, %s18, 1
      %p2361 = scmp.lt.s32.totalorder %s2358, 35
      %s2362 = scalar_select %p2361, %s2358, 35
      %s2363 = smul.addr %s2360, 36
      %s2364 = sadd.s32 %s2362, %s2363
      %s2365 = smul.addr %s2364, 4
      %s2366 = scalar_lea.vmem %s3, %s2365
      // Predicated region
      $region33: #{_fused_conv_call.1} parent=31 // pred_check
        %p2367 = pneg %p114
      $region34: #{_fused_conv_call.1} parent=31 // pred_check_branch
        %2369 = sbr.rel (%p2367) target = $region36
      $region35: #{_fused_conv_call.1} parent=31 // pred_region
        %s2370 = smul.u32 36, %s19
      $region36: #{_fused_conv_call.1} parent=31 // pred_fallthru
        _
    $region32: #{_fused_conv_call.1} parent=5 // pred_fallthru
      _
    %p2371 = scmp.le.s32.totalorder 2, %s9
    // Predicated region
    $region37: #{_fused_conv_call.1} parent=5 // pred_check
      %p2372 = pneg %p2371
    $region38: #{_fused_conv_call.1} parent=5 // pred_check_branch
      %2374 = sbr.rel (%p2372) target = $region40
    $region39: #{_fused_conv_call.1} parent=5 // pred_region
      %s2375 = ssub.s32 %s9, 2
      // Predicated region
      $region41: #{_fused_conv_call.1} parent=39 // pred_check
        %p2376 = pneg %p120
      $region42: #{_fused_conv_call.1} parent=39 // pred_check_branch
        %2378 = sbr.rel (%p2376) target = $region44
      $region43: #{_fused_conv_call.1} parent=39 // pred_region
        %s2379 = smul.u32 36, %s21
        %p2380 = scmp.lt.s32.totalorder %s20, 1
        %s2381 = scalar_select %p2380, %s20, 1
        %p2382 = scmp.lt.s32.totalorder %s2379, 35
        %s2383 = scalar_select %p2382, %s2379, 35
        %s2384 = smul.addr %s2381, 36
        %s2385 = sadd.s32 %s2383, %s2384
        %s2386 = smul.addr %s2385, 4
        %s2387 = scalar_lea.vmem %s3, %s2386
      $region44: #{_fused_conv_call.1} parent=39 // pred_fallthru
        _
    $region40: #{_fused_conv_call.1} parent=5 // pred_fallthru
      _
  $region6: #{_fused_conv_call.1} parent=0 // loop_footer
    %s13 = sadd.s32 1, %s9
  $region7: #{_fused_conv_call.1} parent=0 // loop_footer_branch
    %8 = sbr.rel target = $region3
  $region8: #{_fused_conv_call.1} parent=0 // loop_exit
    _

</llo_original>
